<compile_context>
chip_gen: v7x
topology: tpu7x:2x2x1
jax: 0.10.0
libtpu: 0.0.40
codegen_flags: <defaults>
</compile_context>

<pallas_src>
import math

import jax
import jax.numpy as jnp
from jax.experimental import pallas as pl
from jax.experimental.pallas import tpu as pltpu

LANE = 128
SUBLANE = 8


def _round_up(n, m):
    return ((n + m - 1) // m) * m


# ------------------------------ hardware probe -------------------------------
def _detect_hw():
    """(n_tensorcores, bf16_epilogue_ok, vmem_capacity_bytes) -- defensive."""
    kind = ""
    try:
        kind = jax.devices()[0].device_kind.lower()
    except Exception:
        pass
    n_cores = 2 if "7" in kind else 1                # v7x: 2 TensorCores/chip
    bf16_epilogue = ("v6" in kind) or ("7" in kind)  # bf16 VPU/EUP present
    try:
        vmem_cap = int(pltpu.get_tpu_info().vmem_capacity_bytes)
    except Exception:
        vmem_cap = 64 << 20                          # conservative (v7x physical)
    return n_cores, bf16_epilogue, vmem_cap


# ----------------------------- Pallas kernel ---------------------------------
def make_mlp_kernel(num_layers, bf16_epilogue):
    """Kernel refs: (x, w0, b0, w1, b1, ..., out). Whole MLP fused in VMEM."""

    def kernel(*refs):
        o_ref = refs[-1]
        h = refs[0][...]                                   # (TB, in_pad) bf16
        for l in range(num_layers):
            w = refs[1 + 2 * l][...]                       # (fin_pad, fout_pad) bf16
            b = refs[2 + 2 * l][...]                       # (1, fout_pad) f32
            # bf16 MXU matmul with f32 accumulation.
            acc = jnp.dot(h, w, preferred_element_type=jnp.float32)
            last = l == num_layers - 1
            if bf16_epilogue and not last:
                # v6e/v7x: bias add in f32, tanh on the bf16-rounded value
                # (2x EUP throughput; next matmul would round to bf16 anyway).
                h = jnp.tanh((acc + b).astype(jnp.bfloat16))
            else:
                h = jnp.tanh(acc + b)                      # act_fn='tanh', f32
                if not last:
                    h = h.astype(jnp.bfloat16)
        o_ref[...] = h.astype(o_ref.dtype)

    return kernel


# --------------------------- parameter preparation ---------------------------
def prepare_mlp_params(weights_t, biases):
    """Pad feature dims to 128 lanes and cast weights to bf16 -- done ONCE.

    weights_t[l]: (in_l, out_l) f32 (== torch W.T), biases[l]: (out_l,) f32.
    Padded lanes stay exactly 0 through the net (pad weights/biases are 0 and
    tanh(0) == 0), so they never pollute real outputs.
    """
    in_dim = weights_t[0].shape[0]
    in_pad = _round_up(in_dim, LANE)
    w_pads, b_pads, dims_pad = [], [], []
    prev_pad = in_pad
    for w, b in zip(weights_t, biases):
        fin, fout = w.shape
        fout_pad = _round_up(fout, LANE)
        w_p = jnp.pad(w, ((0, prev_pad - fin), (0, fout_pad - fout)))
        w_pads.append(w_p.astype(jnp.bfloat16))
        b_pads.append(jnp.pad(b.reshape(1, -1).astype(jnp.float32),
                              ((0, 0), (0, fout_pad - fout))))
        dims_pad.append(fout_pad)
        prev_pad = fout_pad
    return {
        "weights": w_pads,
        "biases": b_pads,
        "in_dim": in_dim,
        "out_dim": weights_t[-1].shape[1],
        "in_pad": in_pad,
        "dims_pad": dims_pad,
    }


# ------------------------------- tiling choice --------------------------------
def _choose_tiling(batch, n_cores, max_tb):
    """Balanced batch tiles: pad rows to 8, split into n_steps equal tiles."""
    rows = _round_up(max(batch, 1), SUBLANE)
    # At least one tile per TensorCore; more only if a tile would exceed max_tb.
    n_steps = max(n_cores, pl.cdiv(rows, max(max_tb, SUBLANE)))
    if n_steps % n_cores:
        n_steps += n_cores - (n_steps % n_cores)   # equal work per core (v7x)
    tb = _round_up(pl.cdiv(rows, n_steps), SUBLANE)
    return tb, n_steps, tb * n_steps


# ------------------------------- forward pass --------------------------------
def mlp_forward(x, params, *, max_tb=1024):
    """x: (batch, in_dim) f32.  Returns (batch, out_dim) f32."""
    w_pads, b_pads = params["weights"], params["biases"]
    num_layers = len(w_pads)
    in_dim, out_dim = params["in_dim"], params["out_dim"]
    in_pad, dims_pad = params["in_pad"], params["dims_pad"]
    out_pad = dims_pad[-1]
    batch = x.shape[0]

    n_cores, bf16_epilogue, vmem_cap = _detect_hw()
    vmem_budget = int(0.8 * vmem_cap)              # leave headroom below physical

    # Resident (grid-invariant) weight/bias bytes.
    weight_bytes = sum(w.size * 2 + b.size * 4 for w, b in zip(w_pads, b_pads))
    # Per-row bytes of the batch-tiled buffers: bf16 x tile + f32 out tile
    # (double-buffered) plus f32 accumulator slabs per layer.
    per_row = 2 * in_pad * 2 + 2 * out_pad * 4 + 2 * sum(4 * d for d in dims_pad)
    tb_cap = max(SUBLANE,
                 ((vmem_budget // 2 - weight_bytes) // max(per_row, 1))
                 // SUBLANE * SUBLANE)
    tb, n_steps, batch_pad = _choose_tiling(batch, n_cores, min(max_tb, tb_cap))

    # Pad batch rows to the tile grid and input lanes to 128; stream x as bf16.
    x_p = jnp.pad(x, ((0, batch_pad - batch), (0, in_pad - in_dim)))
    x_p = x_p.astype(jnp.bfloat16)
    args = [x_p] + [a for wb in zip(w_pads, b_pads) for a in wb]

    # Cost estimate for XLA's scheduler.
    flops, transcendentals, prev = 0, 0, in_pad
    for d in dims_pad:
        flops += 2 * batch_pad * prev * d
        transcendentals += batch_pad * d
        prev = d
    bytes_accessed = x_p.size * 2 + weight_bytes + batch_pad * out_pad * 4

    vmem_limit = int(min(max(4 * (weight_bytes + tb * per_row), 16 << 20),
                         max(vmem_budget, 16 << 20)))

    def run(single_buffer_weights):
        resident = (pl.Buffered(buffer_count=1)
                    if single_buffer_weights else None)
        in_specs = [pl.BlockSpec((tb, in_pad), lambda i: (i, 0))]
        for w_p, b_p in zip(w_pads, b_pads):
            # Constant index_map -> block resident in VMEM, DMA'd once.
            in_specs += [
                pl.BlockSpec(w_p.shape, lambda i: (0, 0), pipeline_mode=resident),
                pl.BlockSpec(b_p.shape, lambda i: (0, 0), pipeline_mode=resident),
            ]
        return pl.pallas_call(
            make_mlp_kernel(num_layers, bf16_epilogue),
            out_shape=jax.ShapeDtypeStruct((batch_pad, out_pad), jnp.float32),
            grid=(n_steps,),
            in_specs=in_specs,
            out_specs=pl.BlockSpec((tb, out_pad), lambda i: (i, 0)),
            compiler_params=pltpu.CompilerParams(
                dimension_semantics=("parallel",),   # shard batch tiles over TCs
                vmem_limit_bytes=vmem_limit),
            cost_estimate=pl.CostEstimate(
                flops=int(flops),
                transcendentals=int(transcendentals),
                bytes_accessed=int(bytes_accessed)),
        )(*args)

    try:
        out = run(single_buffer_weights=True)
    except Exception:
        # Fallback for jax builds without pipeline_mode support on pallas_call.
        out = run(single_buffer_weights=False)

    # Slice padded batch rows and padded output lanes off outside the kernel.
    return out[:batch, :out_dim]


# --------------------------- parameter creation -------------------------------
def orthogonal_init(key, out_features, in_features, gain):
    """Mirror of torch.nn.init.orthogonal_ (QR of a Gaussian, sign-fixed)."""
    rows, cols = out_features, in_features
    flat = jax.random.normal(key, (max(rows, cols), min(rows, cols)),
                             dtype=jnp.float32)
    q, r = jnp.linalg.qr(flat)
    q = q * jnp.sign(jnp.diag(r))            # make decomposition unique
    if rows < cols:
        q = q.T
    return (gain * q[:rows, :cols]).astype(jnp.float32)


def build_mlp_params(key, structure, init="orthogonal"):
    """structure = [in, h1, ..., out]; returns transposed weights + biases."""
    gain = math.sqrt(2.0)
    weights_t, biases = [], []
    for l in range(len(structure) - 1):
        key, sub = jax.random.split(key)
        in_f, out_f = structure[l], structure[l + 1]
        if init == "orthogonal":
            w = orthogonal_init(sub, out_f, in_f, gain)    # torch layout (out, in)
        else:
            w = 0.1 * jax.random.normal(sub, (out_f, in_f), dtype=jnp.float32)
        weights_t.append(w.T)                              # store as (in, out)
        biases.append(jnp.zeros((out_f,), dtype=jnp.float32))  # nn.init.zeros_
    return weights_t, biases


# ------------------------------- reference ------------------------------------
def mlp_reference(x, weights_t, biases, bf16_epilogue):
    """Pure-JAX reference mirroring the kernel's precision choices."""
    h = x.astype(jnp.bfloat16)
    n = len(weights_t)
    for l, (w, b) in enumerate(zip(weights_t, biases)):
        wq = w.astype(jnp.bfloat16)
        acc = jnp.dot(h.astype(jnp.float32), wq.astype(jnp.float32),
                      preferred_element_type=jnp.float32) + b
        last = l == n - 1
        if bf16_epilogue and not last:
            h = jnp.tanh(acc.astype(jnp.bfloat16))
        else:
            h = jnp.tanh(acc)
            if not last:
                h = h.astype(jnp.bfloat16)
    return h.astype(jnp.float32)


if __name__ == "__main__":
    key = jax.random.PRNGKey(0)

    # structure = [input, hidden..., output]; act_fn = 'tanh' for every layer.
    structure = [16, 32, 32, 8]
    batch = 300   # non-multiple of 8 -> exercises row padding + adaptive tiling

    key, k_x, k_p = jax.random.split(key, 3)
    x = jax.random.normal(k_x, (batch, structure[0]), dtype=jnp.float32)
    weights_t, biases = build_mlp_params(k_p, structure, init="orthogonal")

    # Padding + bf16 cast of the weights happens ONCE here, not per forward.
    params = prepare_mlp_params(weights_t, biases)

    out = mlp_forward(x, params)
    out = jax.block_until_ready(out)

    _, bf16_epi, _ = _detect_hw()
    ref = mlp_reference(x, weights_t, biases, bf16_epi)
    assert out.shape == (batch, structure[-1])
    # bf16 tanh epilogue (v6e/v7x) may differ from XLA's bf16 tanh by ~1 ulp,
    # propagated through two more layers -> use a correspondingly wider bound.
    tol = 2e-2 if bf16_epi else 1e-3
    max_err = float(jnp.max(jnp.abs(out - ref)))
    assert jnp.allclose(out, ref, atol=tol, rtol=tol), (
        f"mismatch vs reference (max abs err {max_err}, tol {tol})")

    print("KERNEL_OK")
</pallas_src>

<mosaic_0001>
module attributes {stable_mosaic.version = 11 : i64} {
  func.func @kernel(%arg0: i32, %arg1: memref<304x128xbf16, #tpu.memory_space<vmem>>, %arg2: memref<128x128xbf16, #tpu.memory_space<vmem>>, %arg3: memref<1x128xf32, #tpu.memory_space<vmem>>, %arg4: memref<128x128xbf16, #tpu.memory_space<vmem>>, %arg5: memref<1x128xf32, #tpu.memory_space<vmem>>, %arg6: memref<128x128xbf16, #tpu.memory_space<vmem>>, %arg7: memref<1x128xf32, #tpu.memory_space<vmem>>, %arg8: memref<304x128xf32, #tpu.memory_space<vmem>>) attributes {dimension_semantics = [#tpu.dimension_semantics<parallel>], iteration_bounds = array<i64: 1>, scalar_prefetch = 0 : i64, scratch_operands = 0 : i64, tpu.core_type = #tpu.core_type<tc>, window_params = [{transform_indices = @transform_0, window_bounds = array<i64: 304, 128>}, {pipeline_mode = #tpu.pipeline_mode<synchronous>, transform_indices = @transform_1, window_bounds = array<i64: 128, 128>}, {pipeline_mode = #tpu.pipeline_mode<synchronous>, transform_indices = @transform_2, window_bounds = array<i64: 1, 128>}, {pipeline_mode = #tpu.pipeline_mode<synchronous>, transform_indices = @transform_3, window_bounds = array<i64: 128, 128>}, {pipeline_mode = #tpu.pipeline_mode<synchronous>, transform_indices = @transform_4, window_bounds = array<i64: 1, 128>}, {pipeline_mode = #tpu.pipeline_mode<synchronous>, transform_indices = @transform_5, window_bounds = array<i64: 128, 128>}, {pipeline_mode = #tpu.pipeline_mode<synchronous>, transform_indices = @transform_6, window_bounds = array<i64: 1, 128>}, {transform_indices = @transform_7, window_bounds = array<i64: 304, 128>}]} {
    %c0 = arith.constant 0 : index
    %c0_0 = arith.constant 0 : index
    %0 = vector.load %arg1[%c0, %c0_0] : memref<304x128xbf16, #tpu.memory_space<vmem>>, vector<304x128xbf16>
    %c0_1 = arith.constant 0 : index
    %c0_2 = arith.constant 0 : index
    %1 = vector.load %arg2[%c0_1, %c0_2] : memref<128x128xbf16, #tpu.memory_space<vmem>>, vector<128x128xbf16>
    %c0_3 = arith.constant 0 : index
    %c0_4 = arith.constant 0 : index
    %2 = vector.load %arg3[%c0_3, %c0_4] : memref<1x128xf32, #tpu.memory_space<vmem>>, vector<1x128xf32>
    %cst = arith.constant dense<0.000000e+00> : vector<304x128xf32>
    %3 = tpu.matmul %0, %1, %cst {dimension_numbers = #tpu.dot_dimension_numbers<[1], [0], [0], [1], [0, 0, 1, 1], [], []>} : vector<304x128xbf16>, vector<128x128xbf16>, vector<304x128xf32> -> vector<304x128xf32>
    %4 = vector.broadcast %2 : vector<1x128xf32> to vector<304x128xf32>
    %5 = arith.addf %3, %4 : vector<304x128xf32>
    %6 = math.tanh %5 : vector<304x128xf32>
    %7 = arith.truncf %6 : vector<304x128xf32> to vector<304x128xbf16>
    %c0_5 = arith.constant 0 : index
    %c0_6 = arith.constant 0 : index
    %8 = vector.load %arg4[%c0_5, %c0_6] : memref<128x128xbf16, #tpu.memory_space<vmem>>, vector<128x128xbf16>
    %c0_7 = arith.constant 0 : index
    %c0_8 = arith.constant 0 : index
    %9 = vector.load %arg5[%c0_7, %c0_8] : memref<1x128xf32, #tpu.memory_space<vmem>>, vector<1x128xf32>
    %cst_9 = arith.constant dense<0.000000e+00> : vector<304x128xf32>
    %10 = tpu.matmul %7, %8, %cst_9 {dimension_numbers = #tpu.dot_dimension_numbers<[1], [0], [0], [1], [0, 0, 1, 1], [], []>} : vector<304x128xbf16>, vector<128x128xbf16>, vector<304x128xf32> -> vector<304x128xf32>
    %11 = vector.broadcast %9 : vector<1x128xf32> to vector<304x128xf32>
    %12 = arith.addf %10, %11 : vector<304x128xf32>
    %13 = math.tanh %12 : vector<304x128xf32>
    %14 = arith.truncf %13 : vector<304x128xf32> to vector<304x128xbf16>
    %c0_10 = arith.constant 0 : index
    %c0_11 = arith.constant 0 : index
    %15 = vector.load %arg6[%c0_10, %c0_11] : memref<128x128xbf16, #tpu.memory_space<vmem>>, vector<128x128xbf16>
    %c0_12 = arith.constant 0 : index
    %c0_13 = arith.constant 0 : index
    %16 = vector.load %arg7[%c0_12, %c0_13] : memref<1x128xf32, #tpu.memory_space<vmem>>, vector<1x128xf32>
    %cst_14 = arith.constant dense<0.000000e+00> : vector<304x128xf32>
    %17 = tpu.matmul %14, %15, %cst_14 {dimension_numbers = #tpu.dot_dimension_numbers<[1], [0], [0], [1], [0, 0, 1, 1], [], []>} : vector<304x128xbf16>, vector<128x128xbf16>, vector<304x128xf32> -> vector<304x128xf32>
    %18 = vector.broadcast %16 : vector<1x128xf32> to vector<304x128xf32>
    %19 = arith.addf %17, %18 : vector<304x128xf32>
    %20 = math.tanh %19 : vector<304x128xf32>
    %c0_15 = arith.constant 0 : index
    %c0_16 = arith.constant 0 : index
    %21 = vector.load %arg8[%c0_15, %c0_16] : memref<304x128xf32, #tpu.memory_space<vmem>>, vector<304x128xf32>
    tpu.vector_store %arg8[%c0_15, %c0_16], %20 {strides = array<i32>} : memref<304x128xf32, #tpu.memory_space<vmem>>, vector<304x128xf32>,
    return
  }
  func.func @transform_0(%arg0: i32) -> (i32, i32) {
    %c0_i32 = arith.constant 0 : i32
    %c0_i32_0 = arith.constant 0 : i32
    return %arg0, %c0_i32 : i32, i32
  }
  func.func @transform_1(%arg0: i32) -> (i32, i32) {
    %c0_i32 = arith.constant 0 : i32
    %c0_i32_0 = arith.constant 0 : i32
    %c0_i32_1 = arith.constant 0 : i32
    return %c0_i32, %c0_i32_0 : i32, i32
  }
  func.func @transform_2(%arg0: i32) -> (i32, i32) {
    %c0_i32 = arith.constant 0 : i32
    %c0_i32_0 = arith.constant 0 : i32
    %c0_i32_1 = arith.constant 0 : i32
    return %c0_i32, %c0_i32_0 : i32, i32
  }
  func.func @transform_3(%arg0: i32) -> (i32, i32) {
    %c0_i32 = arith.constant 0 : i32
    %c0_i32_0 = arith.constant 0 : i32
    %c0_i32_1 = arith.constant 0 : i32
    return %c0_i32, %c0_i32_0 : i32, i32
  }
  func.func @transform_4(%arg0: i32) -> (i32, i32) {
    %c0_i32 = arith.constant 0 : i32
    %c0_i32_0 = arith.constant 0 : i32
    %c0_i32_1 = arith.constant 0 : i32
    return %c0_i32, %c0_i32_0 : i32, i32
  }
  func.func @transform_5(%arg0: i32) -> (i32, i32) {
    %c0_i32 = arith.constant 0 : i32
    %c0_i32_0 = arith.constant 0 : i32
    %c0_i32_1 = arith.constant 0 : i32
    return %c0_i32, %c0_i32_0 : i32, i32
  }
  func.func @transform_6(%arg0: i32) -> (i32, i32) {
    %c0_i32 = arith.constant 0 : i32
    %c0_i32_0 = arith.constant 0 : i32
    %c0_i32_1 = arith.constant 0 : i32
    return %c0_i32, %c0_i32_0 : i32, i32
  }
  func.func @transform_7(%arg0: i32) -> (i32, i32) {
    %c0_i32 = arith.constant 0 : i32
    %c0_i32_0 = arith.constant 0 : i32
    return %arg0, %c0_i32 : i32, i32
  }
}

module attributes {stable_mosaic.version = 11 : i64} {
  func.func @kernel(%arg0: i32, %arg1: memref<304x128xbf16, #tpu.memory_space<vmem>>, %arg2: memref<128x128xbf16, #tpu.memory_space<vmem>>, %arg3: memref<1x128xf32, #tpu.memory_space<vmem>>, %arg4: memref<128x128xbf16, #tpu.memory_space<vmem>>, %arg5: memref<1x128xf32, #tpu.memory_space<vmem>>, %arg6: memref<128x128xbf16, #tpu.memory_space<vmem>>, %arg7: memref<1x128xf32, #tpu.memory_space<vmem>>, %arg8: memref<304x128xf32, #tpu.memory_space<vmem>>) attributes {dimension_semantics = [#tpu.dimension_semantics<parallel>], iteration_bounds = array<i64: 1>, scalar_prefetch = 0 : i64, scratch_operands = 0 : i64, tpu.core_type = #tpu.core_type<tc>, window_params = [{transform_indices = @transform_0, window_bounds = array<i64: 304, 128>}, {pipeline_mode = #tpu.pipeline_mode<synchronous>, transform_indices = @transform_1, window_bounds = array<i64: 128, 128>}, {pipeline_mode = #tpu.pipeline_mode<synchronous>, transform_indices = @transform_2, window_bounds = array<i64: 1, 128>}, {pipeline_mode = #tpu.pipeline_mode<synchronous>, transform_indices = @transform_3, window_bounds = array<i64: 128, 128>}, {pipeline_mode = #tpu.pipeline_mode<synchronous>, transform_indices = @transform_4, window_bounds = array<i64: 1, 128>}, {pipeline_mode = #tpu.pipeline_mode<synchronous>, transform_indices = @transform_5, window_bounds = array<i64: 128, 128>}, {pipeline_mode = #tpu.pipeline_mode<synchronous>, transform_indices = @transform_6, window_bounds = array<i64: 1, 128>}, {transform_indices = @transform_7, window_bounds = array<i64: 304, 128>}]} {
    %c0 = arith.constant 0 : index
    %c0_0 = arith.constant 0 : index
    %0 = vector.load %arg1[%c0, %c0_0] : memref<304x128xbf16, #tpu.memory_space<vmem>>, vector<304x128xbf16>
    %c0_1 = arith.constant 0 : index
    %c0_2 = arith.constant 0 : index
    %1 = vector.load %arg2[%c0_1, %c0_2] : memref<128x128xbf16, #tpu.memory_space<vmem>>, vector<128x128xbf16>
    %c0_3 = arith.constant 0 : index
    %c0_4 = arith.constant 0 : index
    %2 = vector.load %arg3[%c0_3, %c0_4] : memref<1x128xf32, #tpu.memory_space<vmem>>, vector<1x128xf32>
    %cst = arith.constant dense<0.000000e+00> : vector<304x128xf32>
    %3 = tpu.matmul %0, %1, %cst {dimension_numbers = #tpu.dot_dimension_numbers<[1], [0], [0], [1], [0, 0, 1, 1], [], []>} : vector<304x128xbf16>, vector<128x128xbf16>, vector<304x128xf32> -> vector<304x128xf32>
    %4 = vector.broadcast %2 : vector<1x128xf32> to vector<304x128xf32>
    %5 = arith.addf %3, %4 : vector<304x128xf32>
    %6 = math.tanh %5 : vector<304x128xf32>
    %7 = arith.truncf %6 : vector<304x128xf32> to vector<304x128xbf16>
    %c0_5 = arith.constant 0 : index
    %c0_6 = arith.constant 0 : index
    %8 = vector.load %arg4[%c0_5, %c0_6] : memref<128x128xbf16, #tpu.memory_space<vmem>>, vector<128x128xbf16>
    %c0_7 = arith.constant 0 : index
    %c0_8 = arith.constant 0 : index
    %9 = vector.load %arg5[%c0_7, %c0_8] : memref<1x128xf32, #tpu.memory_space<vmem>>, vector<1x128xf32>
    %cst_9 = arith.constant dense<0.000000e+00> : vector<304x128xf32>
    %10 = tpu.matmul %7, %8, %cst_9 {dimension_numbers = #tpu.dot_dimension_numbers<[1], [0], [0], [1], [0, 0, 1, 1], [], []>} : vector<304x128xbf16>, vector<128x128xbf16>, vector<304x128xf32> -> vector<304x128xf32>
    %11 = vector.broadcast %9 : vector<1x128xf32> to vector<304x128xf32>
    %12 = arith.addf %10, %11 : vector<304x128xf32>
    %13 = math.tanh %12 : vector<304x128xf32>
    %14 = arith.truncf %13 : vector<304x128xf32> to vector<304x128xbf16>
    %c0_10 = arith.constant 0 : index
    %c0_11 = arith.constant 0 : index
    %15 = vector.load %arg6[%c0_10, %c0_11] : memref<128x128xbf16, #tpu.memory_space<vmem>>, vector<128x128xbf16>
    %c0_12 = arith.constant 0 : index
    %c0_13 = arith.constant 0 : index
    %16 = vector.load %arg7[%c0_12, %c0_13] : memref<1x128xf32, #tpu.memory_space<vmem>>, vector<1x128xf32>
    %cst_14 = arith.constant dense<0.000000e+00> : vector<304x128xf32>
    %17 = tpu.matmul %14, %15, %cst_14 {dimension_numbers = #tpu.dot_dimension_numbers<[1], [0], [0], [1], [0, 0, 1, 1], [], []>} : vector<304x128xbf16>, vector<128x128xbf16>, vector<304x128xf32> -> vector<304x128xf32>
    %18 = vector.broadcast %16 : vector<1x128xf32> to vector<304x128xf32>
    %19 = arith.addf %17, %18 : vector<304x128xf32>
    %20 = math.tanh %19 : vector<304x128xf32>
    %c0_15 = arith.constant 0 : index
    %c0_16 = arith.constant 0 : index
    %21 = vector.load %arg8[%c0_15, %c0_16] : memref<304x128xf32, #tpu.memory_space<vmem>>, vector<304x128xf32>
    tpu.vector_store %arg8[%c0_15, %c0_16], %20 {strides = array<i32>} : memref<304x128xf32, #tpu.memory_space<vmem>>, vector<304x128xf32>,
    return
  }
  func.func @transform_0(%arg0: i32) -> (i32, i32) {
    %c0_i32 = arith.constant 0 : i32
    %c0_i32_0 = arith.constant 0 : i32
    return %arg0, %c0_i32 : i32, i32
  }
  func.func @transform_1(%arg0: i32) -> (i32, i32) {
    %c0_i32 = arith.constant 0 : i32
    %c0_i32_0 = arith.constant 0 : i32
    %c0_i32_1 = arith.constant 0 : i32
    return %c0_i32, %c0_i32_0 : i32, i32
  }
  func.func @transform_2(%arg0: i32) -> (i32, i32) {
    %c0_i32 = arith.constant 0 : i32
    %c0_i32_0 = arith.constant 0 : i32
    %c0_i32_1 = arith.constant 0 : i32
    return %c0_i32, %c0_i32_0 : i32, i32
  }
  func.func @transform_3(%arg0: i32) -> (i32, i32) {
    %c0_i32 = arith.constant 0 : i32
    %c0_i32_0 = arith.constant 0 : i32
    %c0_i32_1 = arith.constant 0 : i32
    return %c0_i32, %c0_i32_0 : i32, i32
  }
  func.func @transform_4(%arg0: i32) -> (i32, i32) {
    %c0_i32 = arith.constant 0 : i32
    %c0_i32_0 = arith.constant 0 : i32
    %c0_i32_1 = arith.constant 0 : i32
    return %c0_i32, %c0_i32_0 : i32, i32
  }
  func.func @transform_5(%arg0: i32) -> (i32, i32) {
    %c0_i32 = arith.constant 0 : i32
    %c0_i32_0 = arith.constant 0 : i32
    %c0_i32_1 = arith.constant 0 : i32
    return %c0_i32, %c0_i32_0 : i32, i32
  }
  func.func @transform_6(%arg0: i32) -> (i32, i32) {
    %c0_i32 = arith.constant 0 : i32
    %c0_i32_0 = arith.constant 0 : i32
    %c0_i32_1 = arith.constant 0 : i32
    return %c0_i32, %c0_i32_0 : i32, i32
  }
  func.func @transform_7(%arg0: i32) -> (i32, i32) {
    %c0_i32 = arith.constant 0 : i32
    %c0_i32_0 = arith.constant 0 : i32
    return %arg0, %c0_i32 : i32, i32
  }
}

</mosaic_0001>

<llo_original>
// kernel: tpu_custom_call.1
$region0: #{tpu_custom_call.1}
  #allocation0 [shape = 'u32[]', space=smem, size = 0x4, offset = 0x4, fixed_abs, tag = 'smem constant byte address 0x4 - core index']
  #allocation1 [shape = 'u32[144,128]{1,0:T(1,128)}', space=vmem, size = 0x12000, scoped, tag = 'internal scratch']
  %s0 = inlined_call_operand.hbm [shape: bf16[304,128], index: 0, kind: input, shape index: {}]
  %s1 = inlined_call_operand.hbm [shape: bf16[128,128], index: 1, kind: input, shape index: {}]
  %s2 = inlined_call_operand.vmem [shape: f32[1,128], index: 2, kind: input, shape index: {}]
  %s3 = inlined_call_operand.hbm [shape: bf16[128,128], index: 3, kind: input, shape index: {}]
  %s4 = inlined_call_operand.vmem [shape: f32[1,128], index: 4, kind: input, shape index: {}]
  %s5 = inlined_call_operand.hbm [shape: bf16[128,128], index: 5, kind: input, shape index: {}]
  %s6 = inlined_call_operand.vmem [shape: f32[1,128], index: 6, kind: input, shape index: {}]
  %s7 = inlined_call_operand.hbm [shape: f32[304,128], index: 7, kind: output, shape index: {}]
  %s8 = sld [smem:[#allocation0]]
  $region54: #{tpu_custom_call.1} parent=0
    _
  %s10 = ssub.s32 1, %s8
  %s11 = scalar_select 0, %s10, %s8
  $region1: #{tpu_custom_call.1} parent=0
    #allocation2 [shape = 'u8[77824]{0}', space=vmem, size = 0x13000, scoped, tag = 'input window, operand 0, single buffered']
    #allocation3 [shape = 's32[1]{0}', space=sflag, size = 0x4, scoped, tag = 'scoped memory for tpu_custom_call.1']
    #allocation4 [shape = 's32[1]{0}', space=sflag, size = 0x4, scoped, tag = 'scoped memory for tpu_custom_call.1']
    #allocation5 [shape = 'u8[32768]{0}', space=vmem, size = 0x8000, scoped, tag = 'input window, operand 1, single buffered']
    #allocation6 [shape = 's32[1]{0}', space=sflag, size = 0x4, scoped, tag = 'scoped memory for tpu_custom_call.1']
    #allocation7 [shape = 'u8[32768]{0}', space=vmem, size = 0x8000, scoped, tag = 'input window, operand 3, single buffered']
    #allocation8 [shape = 'u8[32768]{0}', space=vmem, size = 0x8000, scoped, tag = 'input window, operand 5, single buffered']
    #allocation9 [shape = 's32[1]{0}', space=sflag, size = 0x4, scoped, tag = 'scoped memory for tpu_custom_call.1']
    #allocation10 [shape = 'u8[155648]{0}', space=vmem, size = 0x26000, scoped, tag = 'output window, operand 0, single buffered']
    %12 = vsyncpa [#allocation3], 0
    %13 = vsyncpa [#allocation6], 0
    %14 = vsyncpa [#allocation9], 0
    %15 = vsyncpa [#allocation4], 0
    // Predicated region
    $region2: #{tpu_custom_call.1} parent=1 // pred_check
      _
    $region3: #{tpu_custom_call.1} parent=1 // pred_check_branch
      %17 = sbr.rel (0) target = $region5
    $region4: #{tpu_custom_call.1} parent=1 // pred_region
      %s19 = ssub.s32 2432, 2432
      %20 = vsyncadd [#allocation3], %s19
      %s21 = sshll.u32 [#allocation2], 4
      %s22 = int_to_ptr.vmem [resolvable:$true] %s21
      %27 = dma.hbm_to_vmem [thread:$0]  %s0, 2432, %s22, [#allocation3], 64, 64, 4
    $region5: #{tpu_custom_call.1} parent=1 // pred_fallthru
      _
    // Predicated region
    $region6: #{tpu_custom_call.1} parent=1 // pred_check
      _
    $region7: #{tpu_custom_call.1} parent=1 // pred_check_branch
      %29 = sbr.rel (0) target = $region9
    $region8: #{tpu_custom_call.1} parent=1 // pred_region
      %s31 = ssub.s32 1024, 1024
      %32 = vsyncadd [#allocation6], %s31
      %s33 = sshll.u32 [#allocation5], 4
      %s34 = int_to_ptr.vmem [resolvable:$true] %s33
      %39 = dma.hbm_to_vmem [thread:$0]  %s1, 1024, %s34, [#allocation6], 64, 64, 4
    $region9: #{tpu_custom_call.1} parent=1 // pred_fallthru
      _
    // Predicated region
    $region10: #{tpu_custom_call.1} parent=1 // pred_check
      _
    $region11: #{tpu_custom_call.1} parent=1 // pred_check_branch
      %41 = sbr.rel (0) target = $region13
    $region12: #{tpu_custom_call.1} parent=1 // pred_region
      _
    $region13: #{tpu_custom_call.1} parent=1 // pred_fallthru
      _
    // Predicated region
    $region14: #{tpu_custom_call.1} parent=1 // pred_check
      _
    $region15: #{tpu_custom_call.1} parent=1 // pred_check_branch
      %43 = sbr.rel (0) target = $region17
    $region16: #{tpu_custom_call.1} parent=1 // pred_region
      %s45 = ssub.s32 1024, 1024
      %46 = vsyncadd [#allocation6], %s45
      %s47 = sshll.u32 [#allocation7], 4
      %s48 = int_to_ptr.vmem [resolvable:$true] %s47
      %53 = dma.hbm_to_vmem [thread:$0]  %s3, 1024, %s48, [#allocation6], 64, 64, 4
    $region17: #{tpu_custom_call.1} parent=1 // pred_fallthru
      _
    // Predicated region
    $region18: #{tpu_custom_call.1} parent=1 // pred_check
      _
    $region19: #{tpu_custom_call.1} parent=1 // pred_check_branch
      %55 = sbr.rel (0) target = $region21
    $region20: #{tpu_custom_call.1} parent=1 // pred_region
      _
    $region21: #{tpu_custom_call.1} parent=1 // pred_fallthru
      _
    // Predicated region
    $region22: #{tpu_custom_call.1} parent=1 // pred_check
      _
    $region23: #{tpu_custom_call.1} parent=1 // pred_check_branch
      %57 = sbr.rel (0) target = $region25
    $region24: #{tpu_custom_call.1} parent=1 // pred_region
      %s59 = ssub.s32 1024, 1024
      %60 = vsyncadd [#allocation9], %s59
      %s61 = sshll.u32 [#allocation8], 4
      %s62 = int_to_ptr.vmem [resolvable:$true] %s61
      %67 = dma.hbm_to_vmem [thread:$0]  %s5, 1024, %s62, [#allocation9], 64, 64, 4
    $region25: #{tpu_custom_call.1} parent=1 // pred_fallthru
      _
    // Predicated region
    $region26: #{tpu_custom_call.1} parent=1 // pred_check
      _
    $region27: #{tpu_custom_call.1} parent=1 // pred_check_branch
      %69 = sbr.rel (0) target = $region29
    $region28: #{tpu_custom_call.1} parent=1 // pred_region
      _
    $region29: #{tpu_custom_call.1} parent=1 // pred_fallthru
      _
    // Predicated region
    $region30: #{tpu_custom_call.1} parent=1 // pred_check
      _
    $region31: #{tpu_custom_call.1} parent=1 // pred_check_branch
      %71 = sbr.rel (0) target = $region33
    $region32: #{tpu_custom_call.1} parent=1 // pred_region
      %72 = dma.done [#allocation3], 2432
    $region33: #{tpu_custom_call.1} parent=1 // pred_fallthru
      _
    // Predicated region
    $region34: #{tpu_custom_call.1} parent=1 // pred_check
      _
    $region35: #{tpu_custom_call.1} parent=1 // pred_check_branch
      %74 = sbr.rel (0) target = $region37
    $region36: #{tpu_custom_call.1} parent=1 // pred_region
      %75 = dma.done [#allocation6], 1024
    $region37: #{tpu_custom_call.1} parent=1 // pred_fallthru
      _
    // Predicated region
    $region38: #{tpu_custom_call.1} parent=1 // pred_check
      _
    $region39: #{tpu_custom_call.1} parent=1 // pred_check_branch
      %77 = sbr.rel (0) target = $region41
    $region40: #{tpu_custom_call.1} parent=1 // pred_region
      %78 = dma.done [#allocation6], 1024
    $region41: #{tpu_custom_call.1} parent=1 // pred_fallthru
      _
    // Predicated region
    $region42: #{tpu_custom_call.1} parent=1 // pred_check
      _
    $region43: #{tpu_custom_call.1} parent=1 // pred_check_branch
      %80 = sbr.rel (0) target = $region45
    $region44: #{tpu_custom_call.1} parent=1 // pred_region
      %81 = dma.done [#allocation9], 1024
    $region45: #{tpu_custom_call.1} parent=1 // pred_fallthru
      _
    %v83 = vld [vmem:[#allocation2] sm:$0xf]
    %v84 = vld [vmem:[#allocation2 + $0x4] sm:$0xf]
    %v85 = vld [vmem:[#allocation2 + $0x8] sm:$0xf]
    %v86 = vld [vmem:[#allocation2 + $0xc] sm:$0xf]
    %v87 = vld [vmem:[#allocation2 + $0x10] sm:$0xf]
    %v88 = vld [vmem:[#allocation2 + $0x14] sm:$0xf]
    %v89 = vld [vmem:[#allocation2 + $0x18] sm:$0xf]
    %v90 = vld [vmem:[#allocation2 + $0x1c] sm:$0xf]
    %v91 = vld [vmem:[#allocation2 + $0x20] sm:$0xf]
    %v92 = vld [vmem:[#allocation2 + $0x24] sm:$0xf]
    %v93 = vld [vmem:[#allocation2 + $0x28] sm:$0xf]
    %v94 = vld [vmem:[#allocation2 + $0x2c] sm:$0xf]
    %v95 = vld [vmem:[#allocation2 + $0x30] sm:$0xf]
    %v96 = vld [vmem:[#allocation2 + $0x34] sm:$0xf]
    %v97 = vld [vmem:[#allocation2 + $0x38] sm:$0xf]
    %v98 = vld [vmem:[#allocation2 + $0x3c] sm:$0xf]
    %v99 = vld [vmem:[#allocation2 + $0x40] sm:$0xf]
    %v100 = vld [vmem:[#allocation2 + $0x44] sm:$0xf]
    %v101 = vld [vmem:[#allocation2 + $0x48] sm:$0xf]
    %v102 = vld [vmem:[#allocation2 + $0x4c] sm:$0xf]
    %v103 = vld [vmem:[#allocation2 + $0x50] sm:$0xf]
    %v104 = vld [vmem:[#allocation2 + $0x54] sm:$0xf]
    %v105 = vld [vmem:[#allocation2 + $0x58] sm:$0xf]
    %v106 = vld [vmem:[#allocation2 + $0x5c] sm:$0xf]
    %v107 = vld [vmem:[#allocation2 + $0x60] sm:$0xf]
    %v108 = vld [vmem:[#allocation2 + $0x64] sm:$0xf]
    %v109 = vld [vmem:[#allocation2 + $0x68] sm:$0xf]
    %v110 = vld [vmem:[#allocation2 + $0x6c] sm:$0xf]
    %v111 = vld [vmem:[#allocation2 + $0x70] sm:$0xf]
    %v112 = vld [vmem:[#allocation2 + $0x74] sm:$0xf]
    %v113 = vld [vmem:[#allocation2 + $0x78] sm:$0xf]
    %v114 = vld [vmem:[#allocation2 + $0x7c] sm:$0xf]
    %v115 = vld [vmem:[#allocation2 + $0x80] sm:$0xf]
    %v116 = vld [vmem:[#allocation2 + $0x84] sm:$0xf]
    %v117 = vld [vmem:[#allocation2 + $0x88] sm:$0xf]
    %v118 = vld [vmem:[#allocation2 + $0x8c] sm:$0xf]
    %v119 = vld [vmem:[#allocation2 + $0x90] sm:$0xf]
    %v120 = vld [vmem:[#allocation2 + $0x94] sm:$0xf]
    %v121 = vld [vmem:[#allocation5] sm:$0xf]
    %v122 = vld [vmem:[#allocation5 + $0x4] sm:$0xf]
    %v123 = vld [vmem:[#allocation5 + $0x8] sm:$0xf]
    %v124 = vld [vmem:[#allocation5 + $0xc] sm:$0xf]
    %v125 = vld [vmem:[#allocation5 + $0x10] sm:$0xf]
    %v126 = vld [vmem:[#allocation5 + $0x14] sm:$0xf]
    %v127 = vld [vmem:[#allocation5 + $0x18] sm:$0xf]
    %v128 = vld [vmem:[#allocation5 + $0x1c] sm:$0xf]
    %v129 = vld [vmem:[#allocation5 + $0x20] sm:$0xf]
    %v130 = vld [vmem:[#allocation5 + $0x24] sm:$0xf]
    %v131 = vld [vmem:[#allocation5 + $0x28] sm:$0xf]
    %v132 = vld [vmem:[#allocation5 + $0x2c] sm:$0xf]
    %v133 = vld [vmem:[#allocation5 + $0x30] sm:$0xf]
    %v134 = vld [vmem:[#allocation5 + $0x34] sm:$0xf]
    %v135 = vld [vmem:[#allocation5 + $0x38] sm:$0xf]
    %v136 = vld [vmem:[#allocation5 + $0x3c] sm:$0xf]
    %v137 = vld [vmem:[%s2] sm:$0x1]
    %v139 = vlaneseq
    %v140 = vshrl.u32 %v139, 7
    %v141 = vsub.s32 0, %v140
    %v142 = vrot.slane %v137, %v141
    %v182 = vunpack.c.l.b16 %v83
    %v183 = vunpack.c.l.b16 %v84
    %v184 = vunpack.c.l.b16 %v85
    %v185 = vunpack.c.l.b16 %v86
    %v186 = vunpack.c.l.b16 %v87
    %v187 = vunpack.c.l.b16 %v88
    %v188 = vunpack.c.l.b16 %v89
    %v189 = vunpack.c.l.b16 %v90
    %v190 = vunpack.c.l.b16 %v91
    %v191 = vunpack.c.l.b16 %v92
    %v192 = vunpack.c.l.b16 %v93
    %v193 = vunpack.c.l.b16 %v94
    %v194 = vunpack.c.l.b16 %v95
    %v195 = vunpack.c.l.b16 %v96
    %v196 = vunpack.c.l.b16 %v97
    %v197 = vunpack.c.l.b16 %v98
    %v198 = vunpack.c.l.b16 %v99
    %v199 = vunpack.c.l.b16 %v100
    %v200 = vunpack.c.l.b16 %v101
    %v201 = vunpack.c.l.b16 %v102
    %v202 = vunpack.c.l.b16 %v103
    %v203 = vunpack.c.l.b16 %v104
    %v204 = vunpack.c.l.b16 %v105
    %v205 = vunpack.c.l.b16 %v106
    %v206 = vunpack.c.l.b16 %v107
    %v207 = vunpack.c.l.b16 %v108
    %v208 = vunpack.c.l.b16 %v109
    %v209 = vunpack.c.l.b16 %v110
    %v210 = vunpack.c.l.b16 %v111
    %v211 = vunpack.c.l.b16 %v112
    %v212 = vunpack.c.l.b16 %v113
    %v213 = vunpack.c.l.b16 %v114
    %v214 = vunpack.c.l.b16 %v115
    %v215 = vunpack.c.l.b16 %v116
    %v216 = vunpack.c.l.b16 %v117
    %v217 = vunpack.c.l.b16 %v118
    %v218 = vunpack.c.l.b16 %v119
    %v219 = vunpack.c.l.b16 %v120
    %v220 = vpack.c.b16 %v183, %v182
    %v221 = vpack.c.b16 %v185, %v184
    %v222 = vpack.c.b16 %v187, %v186
    %v223 = vpack.c.b16 %v189, %v188
    %v224 = vpack.c.b16 %v191, %v190
    %v225 = vpack.c.b16 %v193, %v192
    %v226 = vpack.c.b16 %v195, %v194
    %v227 = vpack.c.b16 %v197, %v196
    %v228 = vpack.c.b16 %v199, %v198
    %v229 = vpack.c.b16 %v201, %v200
    %v230 = vpack.c.b16 %v203, %v202
    %v231 = vpack.c.b16 %v205, %v204
    %v232 = vpack.c.b16 %v207, %v206
    %v233 = vpack.c.b16 %v209, %v208
    %v234 = vpack.c.b16 %v211, %v210
    %v235 = vpack.c.b16 %v213, %v212
    %v236 = vpack.c.b16 %v215, %v214
    %v237 = vpack.c.b16 %v217, %v216
    %v238 = vpack.c.b16 %v219, %v218
    %v274 = vunpack.c.l.b16 %v121
    %v275 = vunpack.c.l.b16 %v122
    %v276 = vunpack.c.l.b16 %v123
    %v277 = vunpack.c.l.b16 %v124
    %v278 = vunpack.c.l.b16 %v125
    %v279 = vunpack.c.l.b16 %v126
    %v280 = vunpack.c.l.b16 %v127
    %v281 = vunpack.c.l.b16 %v128
    %v282 = vunpack.c.l.b16 %v129
    %v283 = vunpack.c.l.b16 %v130
    %v284 = vunpack.c.l.b16 %v131
    %v285 = vunpack.c.l.b16 %v132
    %v286 = vunpack.c.l.b16 %v133
    %v287 = vunpack.c.l.b16 %v134
    %v288 = vunpack.c.l.b16 %v135
    %v289 = vunpack.c.l.b16 %v136
    %v290 = vpack.c.b16 %v275, %v274
    %v291 = vpack.c.b16 %v277, %v276
    %v292 = vpack.c.b16 %v279, %v278
    %v293 = vpack.c.b16 %v281, %v280
    %v294 = vpack.c.b16 %v283, %v282
    %v295 = vpack.c.b16 %v285, %v284
    %v296 = vpack.c.b16 %v287, %v286
    %v297 = vpack.c.b16 %v289, %v288
    %306 = vmatprep.subr.bf16.mxu0 0
    %307 = vmatpush1.bf16.msra.mxu0 %v290
    %308 = vmatprep.subr.bf16.mxu0 0
    %309 = vmatpush1.bf16.msra.mxu0 %v291
    %310 = vmatprep.subr.bf16.mxu0 0
    %311 = vmatpush1.bf16.msra.mxu0 %v292
    %312 = vmatprep.subr.bf16.mxu0 0
    %313 = vmatpush1.bf16.msra.mxu0 %v293
    %314 = vmatprep.subr.bf16.mxu0 0
    %315 = vmatpush1.bf16.msra.mxu0 %v294
    %316 = vmatprep.subr.bf16.mxu0 0
    %317 = vmatpush1.bf16.msra.mxu0 %v295
    %318 = vmatprep.subr.bf16.mxu0 0
    %319 = vmatpush1.bf16.msra.mxu0 %v296
    %320 = vmatprep.subr.bf16.mxu0 0
    %321 = vmatpush1.bf16.msra.mxu0 %v297
    %322 = vmatprep.subr.bf16.mxu0 0
    %323 = vmatpush1.bf16.msra.mxu0 0
    %324 = vmatprep.subr.bf16.mxu0 0
    %325 = vmatpush1.bf16.msra.mxu0 0
    %326 = vmatprep.subr.bf16.mxu0 0
    %327 = vmatpush1.bf16.msra.mxu0 0
    %328 = vmatprep.subr.bf16.mxu0 0
    %329 = vmatpush1.bf16.msra.mxu0 0
    %330 = vmatprep.subr.bf16.mxu0 0
    %331 = vmatpush1.bf16.msra.mxu0 0
    %332 = vmatprep.subr.bf16.mxu0 0
    %333 = vmatpush1.bf16.msra.mxu0 0
    %334 = vmatprep.subr.bf16.mxu0 0
    %335 = vmatpush1.bf16.msra.mxu0 0
    %336 = vmatprep.subr.bf16.mxu0 0
    %337 = vmatpush1.bf16.msra.mxu0 0
    %338 = vmatprep.mubr.bf16.mxu0 0
    %339 = vmatmul.mubr.bf16.gmra.mrb[0].mxu0 %v220
    %v340 = vpop.f32.mrb[0].mxu0
    %v341 = vadd.f32 %v142, %v340
    %v342 = vpop.f32.mrb[0].mxu0
    %v343 = vpop.f32.mrb[0].mxu0
    %v344 = vadd.f32 %v142, %v343
    %v345 = vpop.f32.mrb[0].mxu0
    %346 = vmatprep.mubr.bf16.mxu0 0
    %347 = vmatmul.mubr.bf16.gmra.mrb[0].mxu0 %v221
    %v348 = vpop.f32.mrb[0].mxu0
    %v349 = vadd.f32 %v142, %v348
    %v350 = vpop.f32.mrb[0].mxu0
    %v351 = vpop.f32.mrb[0].mxu0
    %v352 = vadd.f32 %v142, %v351
    %v353 = vpop.f32.mrb[0].mxu0
    %354 = vmatprep.mubr.bf16.mxu0 0
    %355 = vmatmul.mubr.bf16.gmra.mrb[0].mxu0 %v222
    %v356 = vpop.f32.mrb[0].mxu0
    %v357 = vadd.f32 %v142, %v356
    %v358 = vpop.f32.mrb[0].mxu0
    %v359 = vpop.f32.mrb[0].mxu0
    %v360 = vadd.f32 %v142, %v359
    %v361 = vpop.f32.mrb[0].mxu0
    %362 = vmatprep.mubr.bf16.mxu0 0
    %363 = vmatmul.mubr.bf16.gmra.mrb[0].mxu0 %v223
    %v364 = vpop.f32.mrb[0].mxu0
    %v365 = vadd.f32 %v142, %v364
    %v366 = vpop.f32.mrb[0].mxu0
    %v367 = vpop.f32.mrb[0].mxu0
    %v368 = vadd.f32 %v142, %v367
    %v369 = vpop.f32.mrb[0].mxu0
    %370 = vmatprep.mubr.bf16.mxu0 0
    %371 = vmatmul.mubr.bf16.gmra.mrb[0].mxu0 %v224
    %v372 = vpop.f32.mrb[0].mxu0
    %v373 = vadd.f32 %v142, %v372
    %v374 = vpop.f32.mrb[0].mxu0
    %v375 = vpop.f32.mrb[0].mxu0
    %v376 = vadd.f32 %v142, %v375
    %v377 = vpop.f32.mrb[0].mxu0
    %378 = vmatprep.mubr.bf16.mxu0 0
    %379 = vmatmul.mubr.bf16.gmra.mrb[0].mxu0 %v225
    %v380 = vpop.f32.mrb[0].mxu0
    %v381 = vadd.f32 %v142, %v380
    %v382 = vpop.f32.mrb[0].mxu0
    %v383 = vpop.f32.mrb[0].mxu0
    %v384 = vadd.f32 %v142, %v383
    %v385 = vpop.f32.mrb[0].mxu0
    %386 = vmatprep.mubr.bf16.mxu0 0
    %387 = vmatmul.mubr.bf16.gmra.mrb[0].mxu0 %v226
    %v388 = vpop.f32.mrb[0].mxu0
    %v389 = vadd.f32 %v142, %v388
    %v390 = vpop.f32.mrb[0].mxu0
    %v391 = vpop.f32.mrb[0].mxu0
    %v392 = vadd.f32 %v142, %v391
    %v393 = vpop.f32.mrb[0].mxu0
    %394 = vmatprep.mubr.bf16.mxu0 0
    %395 = vmatmul.mubr.bf16.gmra.mrb[0].mxu0 %v227
    %v396 = vpop.f32.mrb[0].mxu0
    %v397 = vadd.f32 %v142, %v396
    %v398 = vpop.f32.mrb[0].mxu0
    %v399 = vpop.f32.mrb[0].mxu0
    %v400 = vadd.f32 %v142, %v399
    %v401 = vpop.f32.mrb[0].mxu0
    %402 = vmatprep.mubr.bf16.mxu0 0
    %403 = vmatmul.mubr.bf16.gmra.mrb[0].mxu0 %v228
    %v404 = vpop.f32.mrb[0].mxu0
    %v405 = vadd.f32 %v142, %v404
    %v406 = vpop.f32.mrb[0].mxu0
    %v407 = vpop.f32.mrb[0].mxu0
    %v408 = vadd.f32 %v142, %v407
    %v409 = vpop.f32.mrb[0].mxu0
    %410 = vmatprep.mubr.bf16.mxu0 0
    %411 = vmatmul.mubr.bf16.gmra.mrb[0].mxu0 %v229
    %v412 = vpop.f32.mrb[0].mxu0
    %v413 = vadd.f32 %v142, %v412
    %v414 = vpop.f32.mrb[0].mxu0
    %v415 = vpop.f32.mrb[0].mxu0
    %v416 = vadd.f32 %v142, %v415
    %v417 = vpop.f32.mrb[0].mxu0
    %418 = vmatprep.mubr.bf16.mxu0 0
    %419 = vmatmul.mubr.bf16.gmra.mrb[0].mxu0 %v230
    %v420 = vpop.f32.mrb[0].mxu0
    %v421 = vadd.f32 %v142, %v420
    %v422 = vpop.f32.mrb[0].mxu0
    %v423 = vpop.f32.mrb[0].mxu0
    %v424 = vadd.f32 %v142, %v423
    %v425 = vpop.f32.mrb[0].mxu0
    %426 = vmatprep.mubr.bf16.mxu0 0
    %427 = vmatmul.mubr.bf16.gmra.mrb[0].mxu0 %v231
    %v428 = vpop.f32.mrb[0].mxu0
    %v429 = vadd.f32 %v142, %v428
    %v430 = vpop.f32.mrb[0].mxu0
    %v431 = vpop.f32.mrb[0].mxu0
    %v432 = vadd.f32 %v142, %v431
    %v433 = vpop.f32.mrb[0].mxu0
    %434 = vmatprep.mubr.bf16.mxu0 0
    %435 = vmatmul.mubr.bf16.gmra.mrb[0].mxu0 %v232
    %v436 = vpop.f32.mrb[0].mxu0
    %v437 = vadd.f32 %v142, %v436
    %v438 = vpop.f32.mrb[0].mxu0
    %v439 = vpop.f32.mrb[0].mxu0
    %v440 = vadd.f32 %v142, %v439
    %v441 = vpop.f32.mrb[0].mxu0
    %442 = vmatprep.mubr.bf16.mxu0 0
    %443 = vmatmul.mubr.bf16.gmra.mrb[0].mxu0 %v233
    %v444 = vpop.f32.mrb[0].mxu0
    %v445 = vadd.f32 %v142, %v444
    %v446 = vpop.f32.mrb[0].mxu0
    %v447 = vpop.f32.mrb[0].mxu0
    %v448 = vadd.f32 %v142, %v447
    %v449 = vpop.f32.mrb[0].mxu0
    %450 = vmatprep.mubr.bf16.mxu0 0
    %451 = vmatmul.mubr.bf16.gmra.mrb[0].mxu0 %v234
    %v452 = vpop.f32.mrb[0].mxu0
    %v453 = vadd.f32 %v142, %v452
    %v454 = vpop.f32.mrb[0].mxu0
    %v455 = vpop.f32.mrb[0].mxu0
    %v456 = vadd.f32 %v142, %v455
    %v457 = vpop.f32.mrb[0].mxu0
    %458 = vmatprep.mubr.bf16.mxu0 0
    %459 = vmatmul.mubr.bf16.gmra.mrb[0].mxu0 %v235
    %v460 = vpop.f32.mrb[0].mxu0
    %v461 = vadd.f32 %v142, %v460
    %v462 = vpop.f32.mrb[0].mxu0
    %v463 = vpop.f32.mrb[0].mxu0
    %v464 = vadd.f32 %v142, %v463
    %v465 = vpop.f32.mrb[0].mxu0
    %466 = vmatprep.mubr.bf16.mxu0 0
    %467 = vmatmul.mubr.bf16.gmra.mrb[0].mxu0 %v236
    %v468 = vpop.f32.mrb[0].mxu0
    %v469 = vadd.f32 %v142, %v468
    %v470 = vpop.f32.mrb[0].mxu0
    %v471 = vpop.f32.mrb[0].mxu0
    %v472 = vadd.f32 %v142, %v471
    %v473 = vpop.f32.mrb[0].mxu0
    %474 = vmatprep.mubr.bf16.mxu0 0
    %475 = vmatmul.mubr.bf16.gmra.mrb[0].mxu0 %v237
    %v476 = vpop.f32.mrb[0].mxu0
    %v477 = vadd.f32 %v142, %v476
    %v478 = vpop.f32.mrb[0].mxu0
    %v479 = vpop.f32.mrb[0].mxu0
    %v480 = vadd.f32 %v142, %v479
    %v481 = vpop.f32.mrb[0].mxu0
    %482 = vmatprep.mubr.bf16.mxu0 0
    %483 = vmatmul.mubr.bf16.gmra.mrb[0].mxu0 %v238
    %v484 = vpop.f32.mrb[0].mxu0
    %v485 = vadd.f32 %v142, %v484
    %v486 = vpop.f32.mrb[0].mxu0
    %v487 = vpop.f32.mrb[0].mxu0
    %v488 = vadd.f32 %v142, %v487
    %v489 = vpop.f32.mrb[0].mxu0
    %490 = vdwg.mxu0
    %v491 = vtanh.pop %v341
    %v492 = vtanh.pop %v344
    %v493 = vtanh.pop %v349
    %v494 = vtanh.pop %v352
    %v495 = vtanh.pop %v357
    %v496 = vtanh.pop %v360
    %v497 = vtanh.pop %v365
    %v498 = vtanh.pop %v368
    %v499 = vtanh.pop %v373
    %v500 = vtanh.pop %v376
    %v501 = vtanh.pop %v381
    %v502 = vtanh.pop %v384
    %v503 = vtanh.pop %v389
    %v504 = vtanh.pop %v392
    %v505 = vtanh.pop %v397
    %v506 = vtanh.pop %v400
    %v507 = vtanh.pop %v405
    %v508 = vtanh.pop %v408
    %v509 = vtanh.pop %v413
    %v510 = vtanh.pop %v416
    %v511 = vtanh.pop %v421
    %v512 = vtanh.pop %v424
    %v513 = vtanh.pop %v429
    %v514 = vtanh.pop %v432
    %v515 = vtanh.pop %v437
    %v516 = vtanh.pop %v440
    %v517 = vtanh.pop %v445
    %v518 = vtanh.pop %v448
    %v519 = vtanh.pop %v453
    %v520 = vtanh.pop %v456
    %v521 = vtanh.pop %v461
    %v522 = vtanh.pop %v464
    %v523 = vtanh.pop %v469
    %v524 = vtanh.pop %v472
    %v525 = vtanh.pop %v477
    %v526 = vtanh.pop %v480
    %v527 = vtanh.pop %v485
    %v528 = vtanh.pop %v488
    %v529 = vpack.c.bf16 %v492, %v491
    %v530 = vpack.c.bf16 %v494, %v493
    %v531 = vpack.c.bf16 %v496, %v495
    %v532 = vpack.c.bf16 %v498, %v497
    %v533 = vpack.c.bf16 %v500, %v499
    %v534 = vpack.c.bf16 %v502, %v501
    %v535 = vpack.c.bf16 %v504, %v503
    %v536 = vpack.c.bf16 %v506, %v505
    %v537 = vpack.c.bf16 %v508, %v507
    %v538 = vpack.c.bf16 %v510, %v509
    %v539 = vpack.c.bf16 %v512, %v511
    %v540 = vpack.c.bf16 %v514, %v513
    %v541 = vpack.c.bf16 %v516, %v515
    %v542 = vpack.c.bf16 %v518, %v517
    %v543 = vpack.c.bf16 %v520, %v519
    %v544 = vpack.c.bf16 %v522, %v521
    %v545 = vpack.c.bf16 %v524, %v523
    %v546 = vpack.c.bf16 %v526, %v525
    %v547 = vpack.c.bf16 %v528, %v527
    %v548 = vld [vmem:[#allocation7] sm:$0xf]
    %v549 = vld [vmem:[#allocation7 + $0x4] sm:$0xf]
    %v550 = vld [vmem:[#allocation7 + $0x8] sm:$0xf]
    %v551 = vld [vmem:[#allocation7 + $0xc] sm:$0xf]
    %v552 = vld [vmem:[#allocation7 + $0x10] sm:$0xf]
    %v553 = vld [vmem:[#allocation7 + $0x14] sm:$0xf]
    %v554 = vld [vmem:[#allocation7 + $0x18] sm:$0xf]
    %v555 = vld [vmem:[#allocation7 + $0x1c] sm:$0xf]
    %v556 = vld [vmem:[#allocation7 + $0x20] sm:$0xf]
    %v557 = vld [vmem:[#allocation7 + $0x24] sm:$0xf]
    %v558 = vld [vmem:[#allocation7 + $0x28] sm:$0xf]
    %v559 = vld [vmem:[#allocation7 + $0x2c] sm:$0xf]
    %v560 = vld [vmem:[#allocation7 + $0x30] sm:$0xf]
    %v561 = vld [vmem:[#allocation7 + $0x34] sm:$0xf]
    %v562 = vld [vmem:[#allocation7 + $0x38] sm:$0xf]
    %v563 = vld [vmem:[#allocation7 + $0x3c] sm:$0xf]
    %v564 = vld [vmem:[%s4] sm:$0x1]
    %v566 = vlaneseq
    %v567 = vshrl.u32 %v566, 7
    %v568 = vsub.s32 0, %v567
    %v569 = vrot.slane %v564, %v568
    %v587 = vunpack.c.l.b16 %v548
    %v588 = vunpack.c.l.b16 %v549
    %v589 = vunpack.c.l.b16 %v550
    %v590 = vunpack.c.l.b16 %v551
    %v591 = vunpack.c.l.b16 %v552
    %v592 = vunpack.c.l.b16 %v553
    %v593 = vunpack.c.l.b16 %v554
    %v594 = vunpack.c.l.b16 %v555
    %v595 = vunpack.c.l.b16 %v556
    %v596 = vunpack.c.l.b16 %v557
    %v597 = vunpack.c.l.b16 %v558
    %v598 = vunpack.c.l.b16 %v559
    %v599 = vunpack.c.l.b16 %v560
    %v600 = vunpack.c.l.b16 %v561
    %v601 = vunpack.c.l.b16 %v562
    %v602 = vunpack.c.l.b16 %v563
    %v603 = vpack.c.b16 %v588, %v587
    %v604 = vpack.c.b16 %v590, %v589
    %v605 = vpack.c.b16 %v592, %v591
    %v606 = vpack.c.b16 %v594, %v593
    %v607 = vpack.c.b16 %v596, %v595
    %v608 = vpack.c.b16 %v598, %v597
    %v609 = vpack.c.b16 %v600, %v599
    %v610 = vpack.c.b16 %v602, %v601
    %619 = vmatprep.subr.bf16.mxu0 0
    %620 = vmatpush1.bf16.msra.mxu0 %v603
    %621 = vmatprep.subr.bf16.mxu0 0
    %622 = vmatpush1.bf16.msra.mxu0 %v604
    %623 = vmatprep.subr.bf16.mxu0 0
    %624 = vmatpush1.bf16.msra.mxu0 %v605
    %625 = vmatprep.subr.bf16.mxu0 0
    %626 = vmatpush1.bf16.msra.mxu0 %v606
    %627 = vmatprep.subr.bf16.mxu0 0
    %628 = vmatpush1.bf16.msra.mxu0 %v607
    %629 = vmatprep.subr.bf16.mxu0 0
    %630 = vmatpush1.bf16.msra.mxu0 %v608
    %631 = vmatprep.subr.bf16.mxu0 0
    %632 = vmatpush1.bf16.msra.mxu0 %v609
    %633 = vmatprep.subr.bf16.mxu0 0
    %634 = vmatpush1.bf16.msra.mxu0 %v610
    %635 = vmatprep.subr.bf16.mxu0 0
    %636 = vmatpush1.bf16.msra.mxu0 0
    %637 = vmatprep.subr.bf16.mxu0 0
    %638 = vmatpush1.bf16.msra.mxu0 0
    %639 = vmatprep.subr.bf16.mxu0 0
    %640 = vmatpush1.bf16.msra.mxu0 0
    %641 = vmatprep.subr.bf16.mxu0 0
    %642 = vmatpush1.bf16.msra.mxu0 0
    %643 = vmatprep.subr.bf16.mxu0 0
    %644 = vmatpush1.bf16.msra.mxu0 0
    %645 = vmatprep.subr.bf16.mxu0 0
    %646 = vmatpush1.bf16.msra.mxu0 0
    %647 = vmatprep.subr.bf16.mxu0 0
    %648 = vmatpush1.bf16.msra.mxu0 0
    %649 = vmatprep.subr.bf16.mxu0 0
    %650 = vmatpush1.bf16.msra.mxu0 0
    %651 = vmatprep.mubr.bf16.mxu0 0
    %652 = vmatmul.mubr.bf16.gmra.mrb[0].mxu0 %v529
    %v653 = vpop.f32.mrb[0].mxu0
    %v654 = vadd.f32 %v569, %v653
    %v655 = vpop.f32.mrb[0].mxu0
    %v656 = vpop.f32.mrb[0].mxu0
    %v657 = vadd.f32 %v569, %v656
    %v658 = vpop.f32.mrb[0].mxu0
    %659 = vmatprep.mubr.bf16.mxu0 0
    %660 = vmatmul.mubr.bf16.gmra.mrb[0].mxu0 %v530
    %v661 = vpop.f32.mrb[0].mxu0
    %v662 = vadd.f32 %v569, %v661
    %v663 = vpop.f32.mrb[0].mxu0
    %v664 = vpop.f32.mrb[0].mxu0
    %v665 = vadd.f32 %v569, %v664
    %v666 = vpop.f32.mrb[0].mxu0
    %667 = vmatprep.mubr.bf16.mxu0 0
    %668 = vmatmul.mubr.bf16.gmra.mrb[0].mxu0 %v531
    %v669 = vpop.f32.mrb[0].mxu0
    %v670 = vadd.f32 %v569, %v669
    %v671 = vpop.f32.mrb[0].mxu0
    %v672 = vpop.f32.mrb[0].mxu0
    %v673 = vadd.f32 %v569, %v672
    %v674 = vpop.f32.mrb[0].mxu0
    %675 = vmatprep.mubr.bf16.mxu0 0
    %676 = vmatmul.mubr.bf16.gmra.mrb[0].mxu0 %v532
    %v677 = vpop.f32.mrb[0].mxu0
    %v678 = vadd.f32 %v569, %v677
    %v679 = vpop.f32.mrb[0].mxu0
    %v680 = vpop.f32.mrb[0].mxu0
    %v681 = vadd.f32 %v569, %v680
    %v682 = vpop.f32.mrb[0].mxu0
    %683 = vmatprep.mubr.bf16.mxu0 0
    %684 = vmatmul.mubr.bf16.gmra.mrb[0].mxu0 %v533
    %v685 = vpop.f32.mrb[0].mxu0
    %v686 = vadd.f32 %v569, %v685
    %v687 = vpop.f32.mrb[0].mxu0
    %v688 = vpop.f32.mrb[0].mxu0
    %v689 = vadd.f32 %v569, %v688
    %v690 = vpop.f32.mrb[0].mxu0
    %691 = vmatprep.mubr.bf16.mxu0 0
    %692 = vmatmul.mubr.bf16.gmra.mrb[0].mxu0 %v534
    %v693 = vpop.f32.mrb[0].mxu0
    %v694 = vadd.f32 %v569, %v693
    %v695 = vpop.f32.mrb[0].mxu0
    %v696 = vpop.f32.mrb[0].mxu0
    %v697 = vadd.f32 %v569, %v696
    %v698 = vpop.f32.mrb[0].mxu0
    %699 = vmatprep.mubr.bf16.mxu0 0
    %700 = vmatmul.mubr.bf16.gmra.mrb[0].mxu0 %v535
    %v701 = vpop.f32.mrb[0].mxu0
    %v702 = vadd.f32 %v569, %v701
    %v703 = vpop.f32.mrb[0].mxu0
    %v704 = vpop.f32.mrb[0].mxu0
    %v705 = vadd.f32 %v569, %v704
    %v706 = vpop.f32.mrb[0].mxu0
    %707 = vmatprep.mubr.bf16.mxu0 0
    %708 = vmatmul.mubr.bf16.gmra.mrb[0].mxu0 %v536
    %v709 = vpop.f32.mrb[0].mxu0
    %v710 = vadd.f32 %v569, %v709
    %v711 = vpop.f32.mrb[0].mxu0
    %v712 = vpop.f32.mrb[0].mxu0
    %v713 = vadd.f32 %v569, %v712
    %v714 = vpop.f32.mrb[0].mxu0
    %715 = vmatprep.mubr.bf16.mxu0 0
    %716 = vmatmul.mubr.bf16.gmra.mrb[0].mxu0 %v537
    %v717 = vpop.f32.mrb[0].mxu0
    %v718 = vadd.f32 %v569, %v717
    %v719 = vpop.f32.mrb[0].mxu0
    %v720 = vpop.f32.mrb[0].mxu0
    %v721 = vadd.f32 %v569, %v720
    %v722 = vpop.f32.mrb[0].mxu0
    %723 = vmatprep.mubr.bf16.mxu0 0
    %724 = vmatmul.mubr.bf16.gmra.mrb[0].mxu0 %v538
    %v725 = vpop.f32.mrb[0].mxu0
    %v726 = vadd.f32 %v569, %v725
    %v727 = vpop.f32.mrb[0].mxu0
    %v728 = vpop.f32.mrb[0].mxu0
    %v729 = vadd.f32 %v569, %v728
    %v730 = vpop.f32.mrb[0].mxu0
    %731 = vmatprep.mubr.bf16.mxu0 0
    %732 = vmatmul.mubr.bf16.gmra.mrb[0].mxu0 %v539
    %v733 = vpop.f32.mrb[0].mxu0
    %v734 = vadd.f32 %v569, %v733
    %v735 = vpop.f32.mrb[0].mxu0
    %v736 = vpop.f32.mrb[0].mxu0
    %v737 = vadd.f32 %v569, %v736
    %v738 = vpop.f32.mrb[0].mxu0
    %739 = vmatprep.mubr.bf16.mxu0 0
    %740 = vmatmul.mubr.bf16.gmra.mrb[0].mxu0 %v540
    %v741 = vpop.f32.mrb[0].mxu0
    %v742 = vadd.f32 %v569, %v741
    %v743 = vpop.f32.mrb[0].mxu0
    %v744 = vpop.f32.mrb[0].mxu0
    %v745 = vadd.f32 %v569, %v744
    %v746 = vpop.f32.mrb[0].mxu0
    %747 = vmatprep.mubr.bf16.mxu0 0
    %748 = vmatmul.mubr.bf16.gmra.mrb[0].mxu0 %v541
    %v749 = vpop.f32.mrb[0].mxu0
    %v750 = vadd.f32 %v569, %v749
    %v751 = vpop.f32.mrb[0].mxu0
    %v752 = vpop.f32.mrb[0].mxu0
    %v753 = vadd.f32 %v569, %v752
    %v754 = vpop.f32.mrb[0].mxu0
    %755 = vmatprep.mubr.bf16.mxu0 0
    %756 = vmatmul.mubr.bf16.gmra.mrb[0].mxu0 %v542
    %v757 = vpop.f32.mrb[0].mxu0
    %v758 = vadd.f32 %v569, %v757
    %v759 = vpop.f32.mrb[0].mxu0
    %v760 = vpop.f32.mrb[0].mxu0
    %v761 = vadd.f32 %v569, %v760
    %v762 = vpop.f32.mrb[0].mxu0
    %763 = vmatprep.mubr.bf16.mxu0 0
    %764 = vmatmul.mubr.bf16.gmra.mrb[0].mxu0 %v543
    %v765 = vpop.f32.mrb[0].mxu0
    %v766 = vadd.f32 %v569, %v765
    %v767 = vpop.f32.mrb[0].mxu0
    %v768 = vpop.f32.mrb[0].mxu0
    %v769 = vadd.f32 %v569, %v768
    %v770 = vpop.f32.mrb[0].mxu0
    %771 = vmatprep.mubr.bf16.mxu0 0
    %772 = vmatmul.mubr.bf16.gmra.mrb[0].mxu0 %v544
    %v773 = vpop.f32.mrb[0].mxu0
    %v774 = vadd.f32 %v569, %v773
    %v775 = vpop.f32.mrb[0].mxu0
    %v776 = vpop.f32.mrb[0].mxu0
    %v777 = vadd.f32 %v569, %v776
    %v778 = vpop.f32.mrb[0].mxu0
    %779 = vmatprep.mubr.bf16.mxu0 0
    %780 = vmatmul.mubr.bf16.gmra.mrb[0].mxu0 %v545
    %v781 = vpop.f32.mrb[0].mxu0
    %v782 = vadd.f32 %v569, %v781
    %v783 = vpop.f32.mrb[0].mxu0
    %v784 = vpop.f32.mrb[0].mxu0
    %v785 = vadd.f32 %v569, %v784
    %v786 = vpop.f32.mrb[0].mxu0
    %787 = vmatprep.mubr.bf16.mxu0 0
    %788 = vmatmul.mubr.bf16.gmra.mrb[0].mxu0 %v546
    %v789 = vpop.f32.mrb[0].mxu0
    %v790 = vadd.f32 %v569, %v789
    %v791 = vpop.f32.mrb[0].mxu0
    %v792 = vpop.f32.mrb[0].mxu0
    %v793 = vadd.f32 %v569, %v792
    %v794 = vpop.f32.mrb[0].mxu0
    %795 = vmatprep.mubr.bf16.mxu0 0
    %796 = vmatmul.mubr.bf16.gmra.mrb[0].mxu0 %v547
    %v797 = vpop.f32.mrb[0].mxu0
    %v798 = vadd.f32 %v569, %v797
    %v799 = vpop.f32.mrb[0].mxu0
    %v800 = vpop.f32.mrb[0].mxu0
    %v801 = vadd.f32 %v569, %v800
    %v802 = vpop.f32.mrb[0].mxu0
    %803 = vdwg.mxu0
    %v804 = vtanh.pop %v654
    %v805 = vtanh.pop %v657
    %v806 = vtanh.pop %v662
    %v807 = vtanh.pop %v665
    %v808 = vtanh.pop %v670
    %v809 = vtanh.pop %v673
    %v810 = vtanh.pop %v678
    %v811 = vtanh.pop %v681
    %v812 = vtanh.pop %v686
    %v813 = vtanh.pop %v689
    %v814 = vtanh.pop %v694
    %v815 = vtanh.pop %v697
    %v816 = vtanh.pop %v702
    %v817 = vtanh.pop %v705
    %v818 = vtanh.pop %v710
    %v819 = vtanh.pop %v713
    %v820 = vtanh.pop %v718
    %v821 = vtanh.pop %v721
    %v822 = vtanh.pop %v726
    %v823 = vtanh.pop %v729
    %v824 = vtanh.pop %v734
    %v825 = vtanh.pop %v737
    %v826 = vtanh.pop %v742
    %v827 = vtanh.pop %v745
    %v828 = vtanh.pop %v750
    %v829 = vtanh.pop %v753
    %v830 = vtanh.pop %v758
    %v831 = vtanh.pop %v761
    %v832 = vtanh.pop %v766
    %v833 = vtanh.pop %v769
    %v834 = vtanh.pop %v774
    %v835 = vtanh.pop %v777
    %v836 = vtanh.pop %v782
    %v837 = vtanh.pop %v785
    %v838 = vtanh.pop %v790
    %v839 = vtanh.pop %v793
    %v840 = vtanh.pop %v798
    %v841 = vtanh.pop %v801
    %v842 = vpack.c.bf16 %v805, %v804
    %v843 = vpack.c.bf16 %v807, %v806
    %v844 = vpack.c.bf16 %v809, %v808
    %v845 = vpack.c.bf16 %v811, %v810
    %v846 = vpack.c.bf16 %v813, %v812
    %v847 = vpack.c.bf16 %v815, %v814
    %v848 = vpack.c.bf16 %v817, %v816
    %v849 = vpack.c.bf16 %v819, %v818
    %v850 = vpack.c.bf16 %v821, %v820
    %v851 = vpack.c.bf16 %v823, %v822
    %v852 = vpack.c.bf16 %v825, %v824
    %v853 = vpack.c.bf16 %v827, %v826
    %v854 = vpack.c.bf16 %v829, %v828
    %v855 = vpack.c.bf16 %v831, %v830
    %v856 = vpack.c.bf16 %v833, %v832
    %v857 = vpack.c.bf16 %v835, %v834
    %v858 = vpack.c.bf16 %v837, %v836
    %v859 = vpack.c.bf16 %v839, %v838
    %v860 = vpack.c.bf16 %v841, %v840
    %v861 = vld [vmem:[#allocation8] sm:$0xf]
    %v862 = vld [vmem:[#allocation8 + $0x4] sm:$0xf]
    %v863 = vld [vmem:[#allocation8 + $0x8] sm:$0xf]
    %v864 = vld [vmem:[#allocation8 + $0xc] sm:$0xf]
    %v865 = vld [vmem:[#allocation8 + $0x10] sm:$0xf]
    %v866 = vld [vmem:[#allocation8 + $0x14] sm:$0xf]
    %v867 = vld [vmem:[#allocation8 + $0x18] sm:$0xf]
    %v868 = vld [vmem:[#allocation8 + $0x1c] sm:$0xf]
    %v869 = vld [vmem:[#allocation8 + $0x20] sm:$0xf]
    %v870 = vld [vmem:[#allocation8 + $0x24] sm:$0xf]
    %v871 = vld [vmem:[#allocation8 + $0x28] sm:$0xf]
    %v872 = vld [vmem:[#allocation8 + $0x2c] sm:$0xf]
    %v873 = vld [vmem:[#allocation8 + $0x30] sm:$0xf]
    %v874 = vld [vmem:[#allocation8 + $0x34] sm:$0xf]
    %v875 = vld [vmem:[#allocation8 + $0x38] sm:$0xf]
    %v876 = vld [vmem:[#allocation8 + $0x3c] sm:$0xf]
    %v877 = vld [vmem:[%s6] sm:$0x1]
    %v879 = vlaneseq
    %v880 = vshrl.u32 %v879, 7
    %v881 = vsub.s32 0, %v880
    %v882 = vrot.slane %v877, %v881
    %v900 = vunpack.c.l.b16 %v861
    %v901 = vunpack.c.l.b16 %v862
    %v902 = vunpack.c.l.b16 %v863
    %v903 = vunpack.c.l.b16 %v864
    %v904 = vunpack.c.l.b16 %v865
    %v905 = vunpack.c.l.b16 %v866
    %v906 = vunpack.c.l.b16 %v867
    %v907 = vunpack.c.l.b16 %v868
    %v908 = vunpack.c.l.b16 %v869
    %v909 = vunpack.c.l.b16 %v870
    %v910 = vunpack.c.l.b16 %v871
    %v911 = vunpack.c.l.b16 %v872
    %v912 = vunpack.c.l.b16 %v873
    %v913 = vunpack.c.l.b16 %v874
    %v914 = vunpack.c.l.b16 %v875
    %v915 = vunpack.c.l.b16 %v876
    %v916 = vpack.c.b16 %v901, %v900
    %v917 = vpack.c.b16 %v903, %v902
    %v918 = vpack.c.b16 %v905, %v904
    %v919 = vpack.c.b16 %v907, %v906
    %v920 = vpack.c.b16 %v909, %v908
    %v921 = vpack.c.b16 %v911, %v910
    %v922 = vpack.c.b16 %v913, %v912
    %v923 = vpack.c.b16 %v915, %v914
    %932 = vmatprep.subr.bf16.mxu0 0
    %933 = vmatpush1.bf16.msra.mxu0 %v916
    %934 = vmatprep.subr.bf16.mxu0 0
    %935 = vmatpush1.bf16.msra.mxu0 %v917
    %936 = vmatprep.subr.bf16.mxu0 0
    %937 = vmatpush1.bf16.msra.mxu0 %v918
    %938 = vmatprep.subr.bf16.mxu0 0
    %939 = vmatpush1.bf16.msra.mxu0 %v919
    %940 = vmatprep.subr.bf16.mxu0 0
    %941 = vmatpush1.bf16.msra.mxu0 %v920
    %942 = vmatprep.subr.bf16.mxu0 0
    %943 = vmatpush1.bf16.msra.mxu0 %v921
    %944 = vmatprep.subr.bf16.mxu0 0
    %945 = vmatpush1.bf16.msra.mxu0 %v922
    %946 = vmatprep.subr.bf16.mxu0 0
    %947 = vmatpush1.bf16.msra.mxu0 %v923
    %948 = vmatprep.subr.bf16.mxu0 0
    %949 = vmatpush1.bf16.msra.mxu0 0
    %950 = vmatprep.subr.bf16.mxu0 0
    %951 = vmatpush1.bf16.msra.mxu0 0
    %952 = vmatprep.subr.bf16.mxu0 0
    %953 = vmatpush1.bf16.msra.mxu0 0
    %954 = vmatprep.subr.bf16.mxu0 0
    %955 = vmatpush1.bf16.msra.mxu0 0
    %956 = vmatprep.subr.bf16.mxu0 0
    %957 = vmatpush1.bf16.msra.mxu0 0
    %958 = vmatprep.subr.bf16.mxu0 0
    %959 = vmatpush1.bf16.msra.mxu0 0
    %960 = vmatprep.subr.bf16.mxu0 0
    %961 = vmatpush1.bf16.msra.mxu0 0
    %962 = vmatprep.subr.bf16.mxu0 0
    %963 = vmatpush1.bf16.msra.mxu0 0
    %964 = vmatprep.mubr.bf16.mxu0 0
    %965 = vmatmul.mubr.bf16.gmra.mrb[0].mxu0 %v842
    %v966 = vpop.f32.mrb[0].mxu0
    %v967 = vadd.f32 %v882, %v966
    %v968 = vpop.f32.mrb[0].mxu0
    %v969 = vpop.f32.mrb[0].mxu0
    %v970 = vadd.f32 %v882, %v969
    %v971 = vpop.f32.mrb[0].mxu0
    %972 = vmatprep.mubr.bf16.mxu0 0
    %973 = vmatmul.mubr.bf16.gmra.mrb[0].mxu0 %v843
    %v974 = vpop.f32.mrb[0].mxu0
    %v975 = vadd.f32 %v882, %v974
    %v976 = vpop.f32.mrb[0].mxu0
    %v977 = vpop.f32.mrb[0].mxu0
    %v978 = vadd.f32 %v882, %v977
    %v979 = vpop.f32.mrb[0].mxu0
    %980 = vmatprep.mubr.bf16.mxu0 0
    %981 = vmatmul.mubr.bf16.gmra.mrb[0].mxu0 %v844
    %v982 = vpop.f32.mrb[0].mxu0
    %v983 = vadd.f32 %v882, %v982
    %v984 = vpop.f32.mrb[0].mxu0
    %v985 = vpop.f32.mrb[0].mxu0
    %v986 = vadd.f32 %v882, %v985
    %v987 = vpop.f32.mrb[0].mxu0
    %988 = vmatprep.mubr.bf16.mxu0 0
    %989 = vmatmul.mubr.bf16.gmra.mrb[0].mxu0 %v845
    %v990 = vpop.f32.mrb[0].mxu0
    %v991 = vadd.f32 %v882, %v990
    %v992 = vpop.f32.mrb[0].mxu0
    %v993 = vpop.f32.mrb[0].mxu0
    %v994 = vadd.f32 %v882, %v993
    %v995 = vpop.f32.mrb[0].mxu0
    %996 = vmatprep.mubr.bf16.mxu0 0
    %997 = vmatmul.mubr.bf16.gmra.mrb[0].mxu0 %v846
    %v998 = vpop.f32.mrb[0].mxu0
    %v999 = vadd.f32 %v882, %v998
    %v1000 = vpop.f32.mrb[0].mxu0
    %v1001 = vpop.f32.mrb[0].mxu0
    %v1002 = vadd.f32 %v882, %v1001
    %v1003 = vpop.f32.mrb[0].mxu0
    %1004 = vmatprep.mubr.bf16.mxu0 0
    %1005 = vmatmul.mubr.bf16.gmra.mrb[0].mxu0 %v847
    %v1006 = vpop.f32.mrb[0].mxu0
    %v1007 = vadd.f32 %v882, %v1006
    %v1008 = vpop.f32.mrb[0].mxu0
    %v1009 = vpop.f32.mrb[0].mxu0
    %v1010 = vadd.f32 %v882, %v1009
    %v1011 = vpop.f32.mrb[0].mxu0
    %1012 = vmatprep.mubr.bf16.mxu0 0
    %1013 = vmatmul.mubr.bf16.gmra.mrb[0].mxu0 %v848
    %v1014 = vpop.f32.mrb[0].mxu0
    %v1015 = vadd.f32 %v882, %v1014
    %v1016 = vpop.f32.mrb[0].mxu0
    %v1017 = vpop.f32.mrb[0].mxu0
    %v1018 = vadd.f32 %v882, %v1017
    %v1019 = vpop.f32.mrb[0].mxu0
    %1020 = vmatprep.mubr.bf16.mxu0 0
    %1021 = vmatmul.mubr.bf16.gmra.mrb[0].mxu0 %v849
    %v1022 = vpop.f32.mrb[0].mxu0
    %v1023 = vadd.f32 %v882, %v1022
    %v1024 = vpop.f32.mrb[0].mxu0
    %v1025 = vpop.f32.mrb[0].mxu0
    %v1026 = vadd.f32 %v882, %v1025
    %v1027 = vpop.f32.mrb[0].mxu0
    %1028 = vmatprep.mubr.bf16.mxu0 0
    %1029 = vmatmul.mubr.bf16.gmra.mrb[0].mxu0 %v850
    %v1030 = vpop.f32.mrb[0].mxu0
    %v1031 = vadd.f32 %v882, %v1030
    %v1032 = vpop.f32.mrb[0].mxu0
    %v1033 = vpop.f32.mrb[0].mxu0
    %v1034 = vadd.f32 %v882, %v1033
    %v1035 = vpop.f32.mrb[0].mxu0
    %1036 = vmatprep.mubr.bf16.mxu0 0
    %1037 = vmatmul.mubr.bf16.gmra.mrb[0].mxu0 %v851
    %v1038 = vpop.f32.mrb[0].mxu0
    %v1039 = vadd.f32 %v882, %v1038
    %v1040 = vpop.f32.mrb[0].mxu0
    %v1041 = vpop.f32.mrb[0].mxu0
    %v1042 = vadd.f32 %v882, %v1041
    %v1043 = vpop.f32.mrb[0].mxu0
    %1044 = vmatprep.mubr.bf16.mxu0 0
    %1045 = vmatmul.mubr.bf16.gmra.mrb[0].mxu0 %v852
    %v1046 = vpop.f32.mrb[0].mxu0
    %v1047 = vadd.f32 %v882, %v1046
    %v1048 = vpop.f32.mrb[0].mxu0
    %v1049 = vpop.f32.mrb[0].mxu0
    %v1050 = vadd.f32 %v882, %v1049
    %v1051 = vpop.f32.mrb[0].mxu0
    %1052 = vmatprep.mubr.bf16.mxu0 0
    %1053 = vmatmul.mubr.bf16.gmra.mrb[0].mxu0 %v853
    %v1054 = vpop.f32.mrb[0].mxu0
    %v1055 = vadd.f32 %v882, %v1054
    %v1056 = vpop.f32.mrb[0].mxu0
    %v1057 = vpop.f32.mrb[0].mxu0
    %v1058 = vadd.f32 %v882, %v1057
    %v1059 = vpop.f32.mrb[0].mxu0
    %1060 = vmatprep.mubr.bf16.mxu0 0
    %1061 = vmatmul.mubr.bf16.gmra.mrb[0].mxu0 %v854
    %v1062 = vpop.f32.mrb[0].mxu0
    %v1063 = vadd.f32 %v882, %v1062
    %v1064 = vpop.f32.mrb[0].mxu0
    %v1065 = vpop.f32.mrb[0].mxu0
    %v1066 = vadd.f32 %v882, %v1065
    %v1067 = vpop.f32.mrb[0].mxu0
    %1068 = vmatprep.mubr.bf16.mxu0 0
    %1069 = vmatmul.mubr.bf16.gmra.mrb[0].mxu0 %v855
    %v1070 = vpop.f32.mrb[0].mxu0
    %v1071 = vadd.f32 %v882, %v1070
    %v1072 = vpop.f32.mrb[0].mxu0
    %v1073 = vpop.f32.mrb[0].mxu0
    %v1074 = vadd.f32 %v882, %v1073
    %v1075 = vpop.f32.mrb[0].mxu0
    %1076 = vmatprep.mubr.bf16.mxu0 0
    %1077 = vmatmul.mubr.bf16.gmra.mrb[0].mxu0 %v856
    %v1078 = vpop.f32.mrb[0].mxu0
    %v1079 = vadd.f32 %v882, %v1078
    %v1080 = vpop.f32.mrb[0].mxu0
    %v1081 = vpop.f32.mrb[0].mxu0
    %v1082 = vadd.f32 %v882, %v1081
    %v1083 = vpop.f32.mrb[0].mxu0
    %1084 = vmatprep.mubr.bf16.mxu0 0
    %1085 = vmatmul.mubr.bf16.gmra.mrb[0].mxu0 %v857
    %v1086 = vpop.f32.mrb[0].mxu0
    %v1087 = vadd.f32 %v882, %v1086
    %v1088 = vpop.f32.mrb[0].mxu0
    %v1089 = vpop.f32.mrb[0].mxu0
    %v1090 = vadd.f32 %v882, %v1089
    %v1091 = vpop.f32.mrb[0].mxu0
    %1092 = vmatprep.mubr.bf16.mxu0 0
    %1093 = vmatmul.mubr.bf16.gmra.mrb[0].mxu0 %v858
    %v1094 = vpop.f32.mrb[0].mxu0
    %v1095 = vadd.f32 %v882, %v1094
    %v1096 = vpop.f32.mrb[0].mxu0
    %v1097 = vpop.f32.mrb[0].mxu0
    %v1098 = vadd.f32 %v882, %v1097
    %v1099 = vpop.f32.mrb[0].mxu0
    %1100 = vmatprep.mubr.bf16.mxu0 0
    %1101 = vmatmul.mubr.bf16.gmra.mrb[0].mxu0 %v859
    %v1102 = vpop.f32.mrb[0].mxu0
    %v1103 = vadd.f32 %v882, %v1102
    %v1104 = vpop.f32.mrb[0].mxu0
    %v1105 = vpop.f32.mrb[0].mxu0
    %v1106 = vadd.f32 %v882, %v1105
    %v1107 = vpop.f32.mrb[0].mxu0
    %1108 = vmatprep.mubr.bf16.mxu0 0
    %1109 = vmatmul.mubr.bf16.gmra.mrb[0].mxu0 %v860
    %v1110 = vpop.f32.mrb[0].mxu0
    %v1111 = vadd.f32 %v882, %v1110
    %v1112 = vpop.f32.mrb[0].mxu0
    %v1113 = vpop.f32.mrb[0].mxu0
    %v1114 = vadd.f32 %v882, %v1113
    %v1115 = vpop.f32.mrb[0].mxu0
    %1116 = vdwg.mxu0
    %v1117 = vtanh.pop %v967
    %v1118 = vtanh.pop %v970
    %v1119 = vtanh.pop %v975
    %v1120 = vtanh.pop %v978
    %v1121 = vtanh.pop %v983
    %v1122 = vtanh.pop %v986
    %v1123 = vtanh.pop %v991
    %v1124 = vtanh.pop %v994
    %v1125 = vtanh.pop %v999
    %v1126 = vtanh.pop %v1002
    %v1127 = vtanh.pop %v1007
    %v1128 = vtanh.pop %v1010
    %v1129 = vtanh.pop %v1015
    %v1130 = vtanh.pop %v1018
    %v1131 = vtanh.pop %v1023
    %v1132 = vtanh.pop %v1026
    %v1133 = vtanh.pop %v1031
    %v1134 = vtanh.pop %v1034
    %v1135 = vtanh.pop %v1039
    %v1136 = vtanh.pop %v1042
    %v1137 = vtanh.pop %v1047
    %v1138 = vtanh.pop %v1050
    %v1139 = vtanh.pop %v1055
    %v1140 = vtanh.pop %v1058
    %v1141 = vtanh.pop %v1063
    %v1142 = vtanh.pop %v1066
    %v1143 = vtanh.pop %v1071
    %v1144 = vtanh.pop %v1074
    %v1145 = vtanh.pop %v1079
    %v1146 = vtanh.pop %v1082
    %v1147 = vtanh.pop %v1087
    %v1148 = vtanh.pop %v1090
    %v1149 = vtanh.pop %v1095
    %v1150 = vtanh.pop %v1098
    %v1151 = vtanh.pop %v1103
    %v1152 = vtanh.pop %v1106
    %v1153 = vtanh.pop %v1111
    %v1154 = vtanh.pop %v1114
    %1155 = vst [vmem:[#allocation10] sm:$0xff] %v1117
    %1156 = vst [vmem:[#allocation10 + $0x8] sm:$0xff] %v1118
    %1157 = vst [vmem:[#allocation10 + $0x10] sm:$0xff] %v1119
    %1158 = vst [vmem:[#allocation10 + $0x18] sm:$0xff] %v1120
    %1159 = vst [vmem:[#allocation10 + $0x20] sm:$0xff] %v1121
    %1160 = vst [vmem:[#allocation10 + $0x28] sm:$0xff] %v1122
    %1161 = vst [vmem:[#allocation10 + $0x30] sm:$0xff] %v1123
    %1162 = vst [vmem:[#allocation10 + $0x38] sm:$0xff] %v1124
    %1163 = vst [vmem:[#allocation10 + $0x40] sm:$0xff] %v1125
    %1164 = vst [vmem:[#allocation10 + $0x48] sm:$0xff] %v1126
    %1165 = vst [vmem:[#allocation10 + $0x50] sm:$0xff] %v1127
    %1166 = vst [vmem:[#allocation10 + $0x58] sm:$0xff] %v1128
    %1167 = vst [vmem:[#allocation10 + $0x60] sm:$0xff] %v1129
    %1168 = vst [vmem:[#allocation10 + $0x68] sm:$0xff] %v1130
    %1169 = vst [vmem:[#allocation10 + $0x70] sm:$0xff] %v1131
    %1170 = vst [vmem:[#allocation10 + $0x78] sm:$0xff] %v1132
    %1171 = vst [vmem:[#allocation10 + $0x80] sm:$0xff] %v1133
    %1172 = vst [vmem:[#allocation10 + $0x88] sm:$0xff] %v1134
    %1173 = vst [vmem:[#allocation10 + $0x90] sm:$0xff] %v1135
    %1174 = vst [vmem:[#allocation10 + $0x98] sm:$0xff] %v1136
    %1175 = vst [vmem:[#allocation10 + $0xa0] sm:$0xff] %v1137
    %1176 = vst [vmem:[#allocation10 + $0xa8] sm:$0xff] %v1138
    %1177 = vst [vmem:[#allocation10 + $0xb0] sm:$0xff] %v1139
    %1178 = vst [vmem:[#allocation10 + $0xb8] sm:$0xff] %v1140
    %1179 = vst [vmem:[#allocation10 + $0xc0] sm:$0xff] %v1141
    %1180 = vst [vmem:[#allocation10 + $0xc8] sm:$0xff] %v1142
    %1181 = vst [vmem:[#allocation10 + $0xd0] sm:$0xff] %v1143
    %1182 = vst [vmem:[#allocation10 + $0xd8] sm:$0xff] %v1144
    %1183 = vst [vmem:[#allocation10 + $0xe0] sm:$0xff] %v1145
    %1184 = vst [vmem:[#allocation10 + $0xe8] sm:$0xff] %v1146
    %1185 = vst [vmem:[#allocation10 + $0xf0] sm:$0xff] %v1147
    %1186 = vst [vmem:[#allocation10 + $0xf8] sm:$0xff] %v1148
    %1187 = vst [vmem:[#allocation10 + $0x100] sm:$0xff] %v1149
    %1188 = vst [vmem:[#allocation10 + $0x108] sm:$0xff] %v1150
    %1189 = vst [vmem:[#allocation10 + $0x110] sm:$0xff] %v1151
    %1190 = vst [vmem:[#allocation10 + $0x118] sm:$0xff] %v1152
    %1191 = vst [vmem:[#allocation10 + $0x120] sm:$0xff] %v1153
    %1192 = vst [vmem:[#allocation10 + $0x128] sm:$0xff] %v1154
    // Predicated region
    $region46: #{tpu_custom_call.1} parent=1 // pred_check
      _
    $region47: #{tpu_custom_call.1} parent=1 // pred_check_branch
      %1194 = sbr.rel (0) target = $region49
    $region48: #{tpu_custom_call.1} parent=1 // pred_region
      %s1196 = ssub.s32 4864, 4864
      %1197 = vsyncadd [#allocation4], %s1196
      %s1198 = sshll.u32 [#allocation10], 4
      %s1199 = int_to_ptr.vmem [resolvable:$true] %s1198
      %1204 = dma.vmem_to_hbm [thread:$0]  %s1199, 4864, %s7, [#allocation4], 128, 128, 8
    $region49: #{tpu_custom_call.1} parent=1 // pred_fallthru
      _
    // Predicated region
    $region50: #{tpu_custom_call.1} parent=1 // pred_check
      _
    $region51: #{tpu_custom_call.1} parent=1 // pred_check_branch
      %1206 = sbr.rel (0) target = $region53
    $region52: #{tpu_custom_call.1} parent=1 // pred_region
      %1207 = dma.done [#allocation4], 4864
    $region53: #{tpu_custom_call.1} parent=1 // pred_fallthru
      _
    %1208 = vsyncpa [#allocation3], 1
    %1209 = vsyncpa [#allocation6], 1
    %1210 = vsyncpa [#allocation9], 1
    %1211 = vsyncpa [#allocation4], 1

// kernel: tpu_custom_call.1
$region0: #{tpu_custom_call.1}
  #allocation0 [shape = 'u32[]', space=smem, size = 0x4, offset = 0x4, fixed_abs, tag = 'smem constant byte address 0x4 - core index']
  #allocation1 [shape = 'u32[144,128]{1,0:T(1,128)}', space=vmem, size = 0x12000, scoped, tag = 'internal scratch']
  %s0 = inlined_call_operand.hbm [shape: bf16[304,128], index: 0, kind: input, shape index: {}]
  %s1 = inlined_call_operand.hbm [shape: bf16[128,128], index: 1, kind: input, shape index: {}]
  %s2 = inlined_call_operand.vmem [shape: f32[1,128], index: 2, kind: input, shape index: {}]
  %s3 = inlined_call_operand.hbm [shape: bf16[128,128], index: 3, kind: input, shape index: {}]
  %s4 = inlined_call_operand.vmem [shape: f32[1,128], index: 4, kind: input, shape index: {}]
  %s5 = inlined_call_operand.hbm [shape: bf16[128,128], index: 5, kind: input, shape index: {}]
  %s6 = inlined_call_operand.vmem [shape: f32[1,128], index: 6, kind: input, shape index: {}]
  %s7 = inlined_call_operand.hbm [shape: f32[304,128], index: 7, kind: output, shape index: {}]
  %s8 = sld [smem:[#allocation0]]
  $region54: #{tpu_custom_call.1} parent=0
    _
  %s10 = ssub.s32 1, %s8
  %s11 = scalar_select 0, %s10, %s8
  $region1: #{tpu_custom_call.1} parent=0
    #allocation2 [shape = 'u8[77824]{0}', space=vmem, size = 0x13000, scoped, tag = 'input window, operand 0, single buffered']
    #allocation3 [shape = 's32[1]{0}', space=sflag, size = 0x4, scoped, tag = 'scoped memory for tpu_custom_call.1']
    #allocation4 [shape = 's32[1]{0}', space=sflag, size = 0x4, scoped, tag = 'scoped memory for tpu_custom_call.1']
    #allocation5 [shape = 'u8[32768]{0}', space=vmem, size = 0x8000, scoped, tag = 'input window, operand 1, single buffered']
    #allocation6 [shape = 's32[1]{0}', space=sflag, size = 0x4, scoped, tag = 'scoped memory for tpu_custom_call.1']
    #allocation7 [shape = 'u8[32768]{0}', space=vmem, size = 0x8000, scoped, tag = 'input window, operand 3, single buffered']
    #allocation8 [shape = 'u8[32768]{0}', space=vmem, size = 0x8000, scoped, tag = 'input window, operand 5, single buffered']
    #allocation9 [shape = 's32[1]{0}', space=sflag, size = 0x4, scoped, tag = 'scoped memory for tpu_custom_call.1']
    #allocation10 [shape = 'u8[155648]{0}', space=vmem, size = 0x26000, scoped, tag = 'output window, operand 0, single buffered']
    %12 = vsyncpa [#allocation3], 0
    %13 = vsyncpa [#allocation6], 0
    %14 = vsyncpa [#allocation9], 0
    %15 = vsyncpa [#allocation4], 0
    // Predicated region
    $region2: #{tpu_custom_call.1} parent=1 // pred_check
      _
    $region3: #{tpu_custom_call.1} parent=1 // pred_check_branch
      %17 = sbr.rel (0) target = $region5
    $region4: #{tpu_custom_call.1} parent=1 // pred_region
      %s19 = ssub.s32 2432, 2432
      %20 = vsyncadd [#allocation3], %s19
      %s21 = sshll.u32 [#allocation2], 4
      %s22 = int_to_ptr.vmem [resolvable:$true] %s21
      %27 = dma.hbm_to_vmem [thread:$0]  %s0, 2432, %s22, [#allocation3], 64, 64, 4
    $region5: #{tpu_custom_call.1} parent=1 // pred_fallthru
      _
    // Predicated region
    $region6: #{tpu_custom_call.1} parent=1 // pred_check
      _
    $region7: #{tpu_custom_call.1} parent=1 // pred_check_branch
      %29 = sbr.rel (0) target = $region9
    $region8: #{tpu_custom_call.1} parent=1 // pred_region
      %s31 = ssub.s32 1024, 1024
      %32 = vsyncadd [#allocation6], %s31
      %s33 = sshll.u32 [#allocation5], 4
      %s34 = int_to_ptr.vmem [resolvable:$true] %s33
      %39 = dma.hbm_to_vmem [thread:$0]  %s1, 1024, %s34, [#allocation6], 64, 64, 4
    $region9: #{tpu_custom_call.1} parent=1 // pred_fallthru
      _
    // Predicated region
    $region10: #{tpu_custom_call.1} parent=1 // pred_check
      _
    $region11: #{tpu_custom_call.1} parent=1 // pred_check_branch
      %41 = sbr.rel (0) target = $region13
    $region12: #{tpu_custom_call.1} parent=1 // pred_region
      _
    $region13: #{tpu_custom_call.1} parent=1 // pred_fallthru
      _
    // Predicated region
    $region14: #{tpu_custom_call.1} parent=1 // pred_check
      _
    $region15: #{tpu_custom_call.1} parent=1 // pred_check_branch
      %43 = sbr.rel (0) target = $region17
    $region16: #{tpu_custom_call.1} parent=1 // pred_region
      %s45 = ssub.s32 1024, 1024
      %46 = vsyncadd [#allocation6], %s45
      %s47 = sshll.u32 [#allocation7], 4
      %s48 = int_to_ptr.vmem [resolvable:$true] %s47
      %53 = dma.hbm_to_vmem [thread:$0]  %s3, 1024, %s48, [#allocation6], 64, 64, 4
    $region17: #{tpu_custom_call.1} parent=1 // pred_fallthru
      _
    // Predicated region
    $region18: #{tpu_custom_call.1} parent=1 // pred_check
      _
    $region19: #{tpu_custom_call.1} parent=1 // pred_check_branch
      %55 = sbr.rel (0) target = $region21
    $region20: #{tpu_custom_call.1} parent=1 // pred_region
      _
    $region21: #{tpu_custom_call.1} parent=1 // pred_fallthru
      _
    // Predicated region
    $region22: #{tpu_custom_call.1} parent=1 // pred_check
      _
    $region23: #{tpu_custom_call.1} parent=1 // pred_check_branch
      %57 = sbr.rel (0) target = $region25
    $region24: #{tpu_custom_call.1} parent=1 // pred_region
      %s59 = ssub.s32 1024, 1024
      %60 = vsyncadd [#allocation9], %s59
      %s61 = sshll.u32 [#allocation8], 4
      %s62 = int_to_ptr.vmem [resolvable:$true] %s61
      %67 = dma.hbm_to_vmem [thread:$0]  %s5, 1024, %s62, [#allocation9], 64, 64, 4
    $region25: #{tpu_custom_call.1} parent=1 // pred_fallthru
      _
    // Predicated region
    $region26: #{tpu_custom_call.1} parent=1 // pred_check
      _
    $region27: #{tpu_custom_call.1} parent=1 // pred_check_branch
      %69 = sbr.rel (0) target = $region29
    $region28: #{tpu_custom_call.1} parent=1 // pred_region
      _
    $region29: #{tpu_custom_call.1} parent=1 // pred_fallthru
      _
    // Predicated region
    $region30: #{tpu_custom_call.1} parent=1 // pred_check
      _
    $region31: #{tpu_custom_call.1} parent=1 // pred_check_branch
      %71 = sbr.rel (0) target = $region33
    $region32: #{tpu_custom_call.1} parent=1 // pred_region
      %72 = dma.done [#allocation3], 2432
    $region33: #{tpu_custom_call.1} parent=1 // pred_fallthru
      _
    // Predicated region
    $region34: #{tpu_custom_call.1} parent=1 // pred_check
      _
    $region35: #{tpu_custom_call.1} parent=1 // pred_check_branch
      %74 = sbr.rel (0) target = $region37
    $region36: #{tpu_custom_call.1} parent=1 // pred_region
      %75 = dma.done [#allocation6], 1024
    $region37: #{tpu_custom_call.1} parent=1 // pred_fallthru
      _
    // Predicated region
    $region38: #{tpu_custom_call.1} parent=1 // pred_check
      _
    $region39: #{tpu_custom_call.1} parent=1 // pred_check_branch
      %77 = sbr.rel (0) target = $region41
    $region40: #{tpu_custom_call.1} parent=1 // pred_region
      %78 = dma.done [#allocation6], 1024
    $region41: #{tpu_custom_call.1} parent=1 // pred_fallthru
      _
    // Predicated region
    $region42: #{tpu_custom_call.1} parent=1 // pred_check
      _
    $region43: #{tpu_custom_call.1} parent=1 // pred_check_branch
      %80 = sbr.rel (0) target = $region45
    $region44: #{tpu_custom_call.1} parent=1 // pred_region
      %81 = dma.done [#allocation9], 1024
    $region45: #{tpu_custom_call.1} parent=1 // pred_fallthru
      _
    %v83 = vld [vmem:[#allocation2] sm:$0xf]
    %v84 = vld [vmem:[#allocation2 + $0x4] sm:$0xf]
    %v85 = vld [vmem:[#allocation2 + $0x8] sm:$0xf]
    %v86 = vld [vmem:[#allocation2 + $0xc] sm:$0xf]
    %v87 = vld [vmem:[#allocation2 + $0x10] sm:$0xf]
    %v88 = vld [vmem:[#allocation2 + $0x14] sm:$0xf]
    %v89 = vld [vmem:[#allocation2 + $0x18] sm:$0xf]
    %v90 = vld [vmem:[#allocation2 + $0x1c] sm:$0xf]
    %v91 = vld [vmem:[#allocation2 + $0x20] sm:$0xf]
    %v92 = vld [vmem:[#allocation2 + $0x24] sm:$0xf]
    %v93 = vld [vmem:[#allocation2 + $0x28] sm:$0xf]
    %v94 = vld [vmem:[#allocation2 + $0x2c] sm:$0xf]
    %v95 = vld [vmem:[#allocation2 + $0x30] sm:$0xf]
    %v96 = vld [vmem:[#allocation2 + $0x34] sm:$0xf]
    %v97 = vld [vmem:[#allocation2 + $0x38] sm:$0xf]
    %v98 = vld [vmem:[#allocation2 + $0x3c] sm:$0xf]
    %v99 = vld [vmem:[#allocation2 + $0x40] sm:$0xf]
    %v100 = vld [vmem:[#allocation2 + $0x44] sm:$0xf]
    %v101 = vld [vmem:[#allocation2 + $0x48] sm:$0xf]
    %v102 = vld [vmem:[#allocation2 + $0x4c] sm:$0xf]
    %v103 = vld [vmem:[#allocation2 + $0x50] sm:$0xf]
    %v104 = vld [vmem:[#allocation2 + $0x54] sm:$0xf]
    %v105 = vld [vmem:[#allocation2 + $0x58] sm:$0xf]
    %v106 = vld [vmem:[#allocation2 + $0x5c] sm:$0xf]
    %v107 = vld [vmem:[#allocation2 + $0x60] sm:$0xf]
    %v108 = vld [vmem:[#allocation2 + $0x64] sm:$0xf]
    %v109 = vld [vmem:[#allocation2 + $0x68] sm:$0xf]
    %v110 = vld [vmem:[#allocation2 + $0x6c] sm:$0xf]
    %v111 = vld [vmem:[#allocation2 + $0x70] sm:$0xf]
    %v112 = vld [vmem:[#allocation2 + $0x74] sm:$0xf]
    %v113 = vld [vmem:[#allocation2 + $0x78] sm:$0xf]
    %v114 = vld [vmem:[#allocation2 + $0x7c] sm:$0xf]
    %v115 = vld [vmem:[#allocation2 + $0x80] sm:$0xf]
    %v116 = vld [vmem:[#allocation2 + $0x84] sm:$0xf]
    %v117 = vld [vmem:[#allocation2 + $0x88] sm:$0xf]
    %v118 = vld [vmem:[#allocation2 + $0x8c] sm:$0xf]
    %v119 = vld [vmem:[#allocation2 + $0x90] sm:$0xf]
    %v120 = vld [vmem:[#allocation2 + $0x94] sm:$0xf]
    %v121 = vld [vmem:[#allocation5] sm:$0xf]
    %v122 = vld [vmem:[#allocation5 + $0x4] sm:$0xf]
    %v123 = vld [vmem:[#allocation5 + $0x8] sm:$0xf]
    %v124 = vld [vmem:[#allocation5 + $0xc] sm:$0xf]
    %v125 = vld [vmem:[#allocation5 + $0x10] sm:$0xf]
    %v126 = vld [vmem:[#allocation5 + $0x14] sm:$0xf]
    %v127 = vld [vmem:[#allocation5 + $0x18] sm:$0xf]
    %v128 = vld [vmem:[#allocation5 + $0x1c] sm:$0xf]
    %v129 = vld [vmem:[#allocation5 + $0x20] sm:$0xf]
    %v130 = vld [vmem:[#allocation5 + $0x24] sm:$0xf]
    %v131 = vld [vmem:[#allocation5 + $0x28] sm:$0xf]
    %v132 = vld [vmem:[#allocation5 + $0x2c] sm:$0xf]
    %v133 = vld [vmem:[#allocation5 + $0x30] sm:$0xf]
    %v134 = vld [vmem:[#allocation5 + $0x34] sm:$0xf]
    %v135 = vld [vmem:[#allocation5 + $0x38] sm:$0xf]
    %v136 = vld [vmem:[#allocation5 + $0x3c] sm:$0xf]
    %v137 = vld [vmem:[%s2] sm:$0x1]
    %v139 = vlaneseq
    %v140 = vshrl.u32 %v139, 7
    %v141 = vsub.s32 0, %v140
    %v142 = vrot.slane %v137, %v141
    %v182 = vunpack.c.l.b16 %v83
    %v183 = vunpack.c.l.b16 %v84
    %v184 = vunpack.c.l.b16 %v85
    %v185 = vunpack.c.l.b16 %v86
    %v186 = vunpack.c.l.b16 %v87
    %v187 = vunpack.c.l.b16 %v88
    %v188 = vunpack.c.l.b16 %v89
    %v189 = vunpack.c.l.b16 %v90
    %v190 = vunpack.c.l.b16 %v91
    %v191 = vunpack.c.l.b16 %v92
    %v192 = vunpack.c.l.b16 %v93
    %v193 = vunpack.c.l.b16 %v94
    %v194 = vunpack.c.l.b16 %v95
    %v195 = vunpack.c.l.b16 %v96
    %v196 = vunpack.c.l.b16 %v97
    %v197 = vunpack.c.l.b16 %v98
    %v198 = vunpack.c.l.b16 %v99
    %v199 = vunpack.c.l.b16 %v100
    %v200 = vunpack.c.l.b16 %v101
    %v201 = vunpack.c.l.b16 %v102
    %v202 = vunpack.c.l.b16 %v103
    %v203 = vunpack.c.l.b16 %v104
    %v204 = vunpack.c.l.b16 %v105
    %v205 = vunpack.c.l.b16 %v106
    %v206 = vunpack.c.l.b16 %v107
    %v207 = vunpack.c.l.b16 %v108
    %v208 = vunpack.c.l.b16 %v109
    %v209 = vunpack.c.l.b16 %v110
    %v210 = vunpack.c.l.b16 %v111
    %v211 = vunpack.c.l.b16 %v112
    %v212 = vunpack.c.l.b16 %v113
    %v213 = vunpack.c.l.b16 %v114
    %v214 = vunpack.c.l.b16 %v115
    %v215 = vunpack.c.l.b16 %v116
    %v216 = vunpack.c.l.b16 %v117
    %v217 = vunpack.c.l.b16 %v118
    %v218 = vunpack.c.l.b16 %v119
    %v219 = vunpack.c.l.b16 %v120
    %v220 = vpack.c.b16 %v183, %v182
    %v221 = vpack.c.b16 %v185, %v184
    %v222 = vpack.c.b16 %v187, %v186
    %v223 = vpack.c.b16 %v189, %v188
    %v224 = vpack.c.b16 %v191, %v190
    %v225 = vpack.c.b16 %v193, %v192
    %v226 = vpack.c.b16 %v195, %v194
    %v227 = vpack.c.b16 %v197, %v196
    %v228 = vpack.c.b16 %v199, %v198
    %v229 = vpack.c.b16 %v201, %v200
    %v230 = vpack.c.b16 %v203, %v202
    %v231 = vpack.c.b16 %v205, %v204
    %v232 = vpack.c.b16 %v207, %v206
    %v233 = vpack.c.b16 %v209, %v208
    %v234 = vpack.c.b16 %v211, %v210
    %v235 = vpack.c.b16 %v213, %v212
    %v236 = vpack.c.b16 %v215, %v214
    %v237 = vpack.c.b16 %v217, %v216
    %v238 = vpack.c.b16 %v219, %v218
    %v274 = vunpack.c.l.b16 %v121
    %v275 = vunpack.c.l.b16 %v122
    %v276 = vunpack.c.l.b16 %v123
    %v277 = vunpack.c.l.b16 %v124
    %v278 = vunpack.c.l.b16 %v125
    %v279 = vunpack.c.l.b16 %v126
    %v280 = vunpack.c.l.b16 %v127
    %v281 = vunpack.c.l.b16 %v128
    %v282 = vunpack.c.l.b16 %v129
    %v283 = vunpack.c.l.b16 %v130
    %v284 = vunpack.c.l.b16 %v131
    %v285 = vunpack.c.l.b16 %v132
    %v286 = vunpack.c.l.b16 %v133
    %v287 = vunpack.c.l.b16 %v134
    %v288 = vunpack.c.l.b16 %v135
    %v289 = vunpack.c.l.b16 %v136
    %v290 = vpack.c.b16 %v275, %v274
    %v291 = vpack.c.b16 %v277, %v276
    %v292 = vpack.c.b16 %v279, %v278
    %v293 = vpack.c.b16 %v281, %v280
    %v294 = vpack.c.b16 %v283, %v282
    %v295 = vpack.c.b16 %v285, %v284
    %v296 = vpack.c.b16 %v287, %v286
    %v297 = vpack.c.b16 %v289, %v288
    %306 = vmatprep.subr.bf16.mxu0 0
    %307 = vmatpush1.bf16.msra.mxu0 %v290
    %308 = vmatprep.subr.bf16.mxu0 0
    %309 = vmatpush1.bf16.msra.mxu0 %v291
    %310 = vmatprep.subr.bf16.mxu0 0
    %311 = vmatpush1.bf16.msra.mxu0 %v292
    %312 = vmatprep.subr.bf16.mxu0 0
    %313 = vmatpush1.bf16.msra.mxu0 %v293
    %314 = vmatprep.subr.bf16.mxu0 0
    %315 = vmatpush1.bf16.msra.mxu0 %v294
    %316 = vmatprep.subr.bf16.mxu0 0
    %317 = vmatpush1.bf16.msra.mxu0 %v295
    %318 = vmatprep.subr.bf16.mxu0 0
    %319 = vmatpush1.bf16.msra.mxu0 %v296
    %320 = vmatprep.subr.bf16.mxu0 0
    %321 = vmatpush1.bf16.msra.mxu0 %v297
    %322 = vmatprep.subr.bf16.mxu0 0
    %323 = vmatpush1.bf16.msra.mxu0 0
    %324 = vmatprep.subr.bf16.mxu0 0
    %325 = vmatpush1.bf16.msra.mxu0 0
    %326 = vmatprep.subr.bf16.mxu0 0
    %327 = vmatpush1.bf16.msra.mxu0 0
    %328 = vmatprep.subr.bf16.mxu0 0
    %329 = vmatpush1.bf16.msra.mxu0 0
    %330 = vmatprep.subr.bf16.mxu0 0
    %331 = vmatpush1.bf16.msra.mxu0 0
    %332 = vmatprep.subr.bf16.mxu0 0
    %333 = vmatpush1.bf16.msra.mxu0 0
    %334 = vmatprep.subr.bf16.mxu0 0
    %335 = vmatpush1.bf16.msra.mxu0 0
    %336 = vmatprep.subr.bf16.mxu0 0
    %337 = vmatpush1.bf16.msra.mxu0 0
    %338 = vmatprep.mubr.bf16.mxu0 0
    %339 = vmatmul.mubr.bf16.gmra.mrb[0].mxu0 %v220
    %v340 = vpop.f32.mrb[0].mxu0
    %v341 = vadd.f32 %v142, %v340
    %v342 = vpop.f32.mrb[0].mxu0
    %v343 = vpop.f32.mrb[0].mxu0
    %v344 = vadd.f32 %v142, %v343
    %v345 = vpop.f32.mrb[0].mxu0
    %346 = vmatprep.mubr.bf16.mxu0 0
    %347 = vmatmul.mubr.bf16.gmra.mrb[0].mxu0 %v221
    %v348 = vpop.f32.mrb[0].mxu0
    %v349 = vadd.f32 %v142, %v348
    %v350 = vpop.f32.mrb[0].mxu0
    %v351 = vpop.f32.mrb[0].mxu0
    %v352 = vadd.f32 %v142, %v351
    %v353 = vpop.f32.mrb[0].mxu0
    %354 = vmatprep.mubr.bf16.mxu0 0
    %355 = vmatmul.mubr.bf16.gmra.mrb[0].mxu0 %v222
    %v356 = vpop.f32.mrb[0].mxu0
    %v357 = vadd.f32 %v142, %v356
    %v358 = vpop.f32.mrb[0].mxu0
    %v359 = vpop.f32.mrb[0].mxu0
    %v360 = vadd.f32 %v142, %v359
    %v361 = vpop.f32.mrb[0].mxu0
    %362 = vmatprep.mubr.bf16.mxu0 0
    %363 = vmatmul.mubr.bf16.gmra.mrb[0].mxu0 %v223
    %v364 = vpop.f32.mrb[0].mxu0
    %v365 = vadd.f32 %v142, %v364
    %v366 = vpop.f32.mrb[0].mxu0
    %v367 = vpop.f32.mrb[0].mxu0
    %v368 = vadd.f32 %v142, %v367
    %v369 = vpop.f32.mrb[0].mxu0
    %370 = vmatprep.mubr.bf16.mxu0 0
    %371 = vmatmul.mubr.bf16.gmra.mrb[0].mxu0 %v224
    %v372 = vpop.f32.mrb[0].mxu0
    %v373 = vadd.f32 %v142, %v372
    %v374 = vpop.f32.mrb[0].mxu0
    %v375 = vpop.f32.mrb[0].mxu0
    %v376 = vadd.f32 %v142, %v375
    %v377 = vpop.f32.mrb[0].mxu0
    %378 = vmatprep.mubr.bf16.mxu0 0
    %379 = vmatmul.mubr.bf16.gmra.mrb[0].mxu0 %v225
    %v380 = vpop.f32.mrb[0].mxu0
    %v381 = vadd.f32 %v142, %v380
    %v382 = vpop.f32.mrb[0].mxu0
    %v383 = vpop.f32.mrb[0].mxu0
    %v384 = vadd.f32 %v142, %v383
    %v385 = vpop.f32.mrb[0].mxu0
    %386 = vmatprep.mubr.bf16.mxu0 0
    %387 = vmatmul.mubr.bf16.gmra.mrb[0].mxu0 %v226
    %v388 = vpop.f32.mrb[0].mxu0
    %v389 = vadd.f32 %v142, %v388
    %v390 = vpop.f32.mrb[0].mxu0
    %v391 = vpop.f32.mrb[0].mxu0
    %v392 = vadd.f32 %v142, %v391
    %v393 = vpop.f32.mrb[0].mxu0
    %394 = vmatprep.mubr.bf16.mxu0 0
    %395 = vmatmul.mubr.bf16.gmra.mrb[0].mxu0 %v227
    %v396 = vpop.f32.mrb[0].mxu0
    %v397 = vadd.f32 %v142, %v396
    %v398 = vpop.f32.mrb[0].mxu0
    %v399 = vpop.f32.mrb[0].mxu0
    %v400 = vadd.f32 %v142, %v399
    %v401 = vpop.f32.mrb[0].mxu0
    %402 = vmatprep.mubr.bf16.mxu0 0
    %403 = vmatmul.mubr.bf16.gmra.mrb[0].mxu0 %v228
    %v404 = vpop.f32.mrb[0].mxu0
    %v405 = vadd.f32 %v142, %v404
    %v406 = vpop.f32.mrb[0].mxu0
    %v407 = vpop.f32.mrb[0].mxu0
    %v408 = vadd.f32 %v142, %v407
    %v409 = vpop.f32.mrb[0].mxu0
    %410 = vmatprep.mubr.bf16.mxu0 0
    %411 = vmatmul.mubr.bf16.gmra.mrb[0].mxu0 %v229
    %v412 = vpop.f32.mrb[0].mxu0
    %v413 = vadd.f32 %v142, %v412
    %v414 = vpop.f32.mrb[0].mxu0
    %v415 = vpop.f32.mrb[0].mxu0
    %v416 = vadd.f32 %v142, %v415
    %v417 = vpop.f32.mrb[0].mxu0
    %418 = vmatprep.mubr.bf16.mxu0 0
    %419 = vmatmul.mubr.bf16.gmra.mrb[0].mxu0 %v230
    %v420 = vpop.f32.mrb[0].mxu0
    %v421 = vadd.f32 %v142, %v420
    %v422 = vpop.f32.mrb[0].mxu0
    %v423 = vpop.f32.mrb[0].mxu0
    %v424 = vadd.f32 %v142, %v423
    %v425 = vpop.f32.mrb[0].mxu0
    %426 = vmatprep.mubr.bf16.mxu0 0
    %427 = vmatmul.mubr.bf16.gmra.mrb[0].mxu0 %v231
    %v428 = vpop.f32.mrb[0].mxu0
    %v429 = vadd.f32 %v142, %v428
    %v430 = vpop.f32.mrb[0].mxu0
    %v431 = vpop.f32.mrb[0].mxu0
    %v432 = vadd.f32 %v142, %v431
    %v433 = vpop.f32.mrb[0].mxu0
    %434 = vmatprep.mubr.bf16.mxu0 0
    %435 = vmatmul.mubr.bf16.gmra.mrb[0].mxu0 %v232
    %v436 = vpop.f32.mrb[0].mxu0
    %v437 = vadd.f32 %v142, %v436
    %v438 = vpop.f32.mrb[0].mxu0
    %v439 = vpop.f32.mrb[0].mxu0
    %v440 = vadd.f32 %v142, %v439
    %v441 = vpop.f32.mrb[0].mxu0
    %442 = vmatprep.mubr.bf16.mxu0 0
    %443 = vmatmul.mubr.bf16.gmra.mrb[0].mxu0 %v233
    %v444 = vpop.f32.mrb[0].mxu0
    %v445 = vadd.f32 %v142, %v444
    %v446 = vpop.f32.mrb[0].mxu0
    %v447 = vpop.f32.mrb[0].mxu0
    %v448 = vadd.f32 %v142, %v447
    %v449 = vpop.f32.mrb[0].mxu0
    %450 = vmatprep.mubr.bf16.mxu0 0
    %451 = vmatmul.mubr.bf16.gmra.mrb[0].mxu0 %v234
    %v452 = vpop.f32.mrb[0].mxu0
    %v453 = vadd.f32 %v142, %v452
    %v454 = vpop.f32.mrb[0].mxu0
    %v455 = vpop.f32.mrb[0].mxu0
    %v456 = vadd.f32 %v142, %v455
    %v457 = vpop.f32.mrb[0].mxu0
    %458 = vmatprep.mubr.bf16.mxu0 0
    %459 = vmatmul.mubr.bf16.gmra.mrb[0].mxu0 %v235
    %v460 = vpop.f32.mrb[0].mxu0
    %v461 = vadd.f32 %v142, %v460
    %v462 = vpop.f32.mrb[0].mxu0
    %v463 = vpop.f32.mrb[0].mxu0
    %v464 = vadd.f32 %v142, %v463
    %v465 = vpop.f32.mrb[0].mxu0
    %466 = vmatprep.mubr.bf16.mxu0 0
    %467 = vmatmul.mubr.bf16.gmra.mrb[0].mxu0 %v236
    %v468 = vpop.f32.mrb[0].mxu0
    %v469 = vadd.f32 %v142, %v468
    %v470 = vpop.f32.mrb[0].mxu0
    %v471 = vpop.f32.mrb[0].mxu0
    %v472 = vadd.f32 %v142, %v471
    %v473 = vpop.f32.mrb[0].mxu0
    %474 = vmatprep.mubr.bf16.mxu0 0
    %475 = vmatmul.mubr.bf16.gmra.mrb[0].mxu0 %v237
    %v476 = vpop.f32.mrb[0].mxu0
    %v477 = vadd.f32 %v142, %v476
    %v478 = vpop.f32.mrb[0].mxu0
    %v479 = vpop.f32.mrb[0].mxu0
    %v480 = vadd.f32 %v142, %v479
    %v481 = vpop.f32.mrb[0].mxu0
    %482 = vmatprep.mubr.bf16.mxu0 0
    %483 = vmatmul.mubr.bf16.gmra.mrb[0].mxu0 %v238
    %v484 = vpop.f32.mrb[0].mxu0
    %v485 = vadd.f32 %v142, %v484
    %v486 = vpop.f32.mrb[0].mxu0
    %v487 = vpop.f32.mrb[0].mxu0
    %v488 = vadd.f32 %v142, %v487
    %v489 = vpop.f32.mrb[0].mxu0
    %490 = vdwg.mxu0
    %v491 = vtanh.pop %v341
    %v492 = vtanh.pop %v344
    %v493 = vtanh.pop %v349
    %v494 = vtanh.pop %v352
    %v495 = vtanh.pop %v357
    %v496 = vtanh.pop %v360
    %v497 = vtanh.pop %v365
    %v498 = vtanh.pop %v368
    %v499 = vtanh.pop %v373
    %v500 = vtanh.pop %v376
    %v501 = vtanh.pop %v381
    %v502 = vtanh.pop %v384
    %v503 = vtanh.pop %v389
    %v504 = vtanh.pop %v392
    %v505 = vtanh.pop %v397
    %v506 = vtanh.pop %v400
    %v507 = vtanh.pop %v405
    %v508 = vtanh.pop %v408
    %v509 = vtanh.pop %v413
    %v510 = vtanh.pop %v416
    %v511 = vtanh.pop %v421
    %v512 = vtanh.pop %v424
    %v513 = vtanh.pop %v429
    %v514 = vtanh.pop %v432
    %v515 = vtanh.pop %v437
    %v516 = vtanh.pop %v440
    %v517 = vtanh.pop %v445
    %v518 = vtanh.pop %v448
    %v519 = vtanh.pop %v453
    %v520 = vtanh.pop %v456
    %v521 = vtanh.pop %v461
    %v522 = vtanh.pop %v464
    %v523 = vtanh.pop %v469
    %v524 = vtanh.pop %v472
    %v525 = vtanh.pop %v477
    %v526 = vtanh.pop %v480
    %v527 = vtanh.pop %v485
    %v528 = vtanh.pop %v488
    %v529 = vpack.c.bf16 %v492, %v491
    %v530 = vpack.c.bf16 %v494, %v493
    %v531 = vpack.c.bf16 %v496, %v495
    %v532 = vpack.c.bf16 %v498, %v497
    %v533 = vpack.c.bf16 %v500, %v499
    %v534 = vpack.c.bf16 %v502, %v501
    %v535 = vpack.c.bf16 %v504, %v503
    %v536 = vpack.c.bf16 %v506, %v505
    %v537 = vpack.c.bf16 %v508, %v507
    %v538 = vpack.c.bf16 %v510, %v509
    %v539 = vpack.c.bf16 %v512, %v511
    %v540 = vpack.c.bf16 %v514, %v513
    %v541 = vpack.c.bf16 %v516, %v515
    %v542 = vpack.c.bf16 %v518, %v517
    %v543 = vpack.c.bf16 %v520, %v519
    %v544 = vpack.c.bf16 %v522, %v521
    %v545 = vpack.c.bf16 %v524, %v523
    %v546 = vpack.c.bf16 %v526, %v525
    %v547 = vpack.c.bf16 %v528, %v527
    %v548 = vld [vmem:[#allocation7] sm:$0xf]
    %v549 = vld [vmem:[#allocation7 + $0x4] sm:$0xf]
    %v550 = vld [vmem:[#allocation7 + $0x8] sm:$0xf]
    %v551 = vld [vmem:[#allocation7 + $0xc] sm:$0xf]
    %v552 = vld [vmem:[#allocation7 + $0x10] sm:$0xf]
    %v553 = vld [vmem:[#allocation7 + $0x14] sm:$0xf]
    %v554 = vld [vmem:[#allocation7 + $0x18] sm:$0xf]
    %v555 = vld [vmem:[#allocation7 + $0x1c] sm:$0xf]
    %v556 = vld [vmem:[#allocation7 + $0x20] sm:$0xf]
    %v557 = vld [vmem:[#allocation7 + $0x24] sm:$0xf]
    %v558 = vld [vmem:[#allocation7 + $0x28] sm:$0xf]
    %v559 = vld [vmem:[#allocation7 + $0x2c] sm:$0xf]
    %v560 = vld [vmem:[#allocation7 + $0x30] sm:$0xf]
    %v561 = vld [vmem:[#allocation7 + $0x34] sm:$0xf]
    %v562 = vld [vmem:[#allocation7 + $0x38] sm:$0xf]
    %v563 = vld [vmem:[#allocation7 + $0x3c] sm:$0xf]
    %v564 = vld [vmem:[%s4] sm:$0x1]
    %v566 = vlaneseq
    %v567 = vshrl.u32 %v566, 7
    %v568 = vsub.s32 0, %v567
    %v569 = vrot.slane %v564, %v568
    %v587 = vunpack.c.l.b16 %v548
    %v588 = vunpack.c.l.b16 %v549
    %v589 = vunpack.c.l.b16 %v550
    %v590 = vunpack.c.l.b16 %v551
    %v591 = vunpack.c.l.b16 %v552
    %v592 = vunpack.c.l.b16 %v553
    %v593 = vunpack.c.l.b16 %v554
    %v594 = vunpack.c.l.b16 %v555
    %v595 = vunpack.c.l.b16 %v556
    %v596 = vunpack.c.l.b16 %v557
    %v597 = vunpack.c.l.b16 %v558
    %v598 = vunpack.c.l.b16 %v559
    %v599 = vunpack.c.l.b16 %v560
    %v600 = vunpack.c.l.b16 %v561
    %v601 = vunpack.c.l.b16 %v562
    %v602 = vunpack.c.l.b16 %v563
    %v603 = vpack.c.b16 %v588, %v587
    %v604 = vpack.c.b16 %v590, %v589
    %v605 = vpack.c.b16 %v592, %v591
    %v606 = vpack.c.b16 %v594, %v593
    %v607 = vpack.c.b16 %v596, %v595
    %v608 = vpack.c.b16 %v598, %v597
    %v609 = vpack.c.b16 %v600, %v599
    %v610 = vpack.c.b16 %v602, %v601
    %619 = vmatprep.subr.bf16.mxu0 0
    %620 = vmatpush1.bf16.msra.mxu0 %v603
    %621 = vmatprep.subr.bf16.mxu0 0
    %622 = vmatpush1.bf16.msra.mxu0 %v604
    %623 = vmatprep.subr.bf16.mxu0 0
    %624 = vmatpush1.bf16.msra.mxu0 %v605
    %625 = vmatprep.subr.bf16.mxu0 0
    %626 = vmatpush1.bf16.msra.mxu0 %v606
    %627 = vmatprep.subr.bf16.mxu0 0
    %628 = vmatpush1.bf16.msra.mxu0 %v607
    %629 = vmatprep.subr.bf16.mxu0 0
    %630 = vmatpush1.bf16.msra.mxu0 %v608
    %631 = vmatprep.subr.bf16.mxu0 0
    %632 = vmatpush1.bf16.msra.mxu0 %v609
    %633 = vmatprep.subr.bf16.mxu0 0
    %634 = vmatpush1.bf16.msra.mxu0 %v610
    %635 = vmatprep.subr.bf16.mxu0 0
    %636 = vmatpush1.bf16.msra.mxu0 0
    %637 = vmatprep.subr.bf16.mxu0 0
    %638 = vmatpush1.bf16.msra.mxu0 0
    %639 = vmatprep.subr.bf16.mxu0 0
    %640 = vmatpush1.bf16.msra.mxu0 0
    %641 = vmatprep.subr.bf16.mxu0 0
    %642 = vmatpush1.bf16.msra.mxu0 0
    %643 = vmatprep.subr.bf16.mxu0 0
    %644 = vmatpush1.bf16.msra.mxu0 0
    %645 = vmatprep.subr.bf16.mxu0 0
    %646 = vmatpush1.bf16.msra.mxu0 0
    %647 = vmatprep.subr.bf16.mxu0 0
    %648 = vmatpush1.bf16.msra.mxu0 0
    %649 = vmatprep.subr.bf16.mxu0 0
    %650 = vmatpush1.bf16.msra.mxu0 0
    %651 = vmatprep.mubr.bf16.mxu0 0
    %652 = vmatmul.mubr.bf16.gmra.mrb[0].mxu0 %v529
    %v653 = vpop.f32.mrb[0].mxu0
    %v654 = vadd.f32 %v569, %v653
    %v655 = vpop.f32.mrb[0].mxu0
    %v656 = vpop.f32.mrb[0].mxu0
    %v657 = vadd.f32 %v569, %v656
    %v658 = vpop.f32.mrb[0].mxu0
    %659 = vmatprep.mubr.bf16.mxu0 0
    %660 = vmatmul.mubr.bf16.gmra.mrb[0].mxu0 %v530
    %v661 = vpop.f32.mrb[0].mxu0
    %v662 = vadd.f32 %v569, %v661
    %v663 = vpop.f32.mrb[0].mxu0
    %v664 = vpop.f32.mrb[0].mxu0
    %v665 = vadd.f32 %v569, %v664
    %v666 = vpop.f32.mrb[0].mxu0
    %667 = vmatprep.mubr.bf16.mxu0 0
    %668 = vmatmul.mubr.bf16.gmra.mrb[0].mxu0 %v531
    %v669 = vpop.f32.mrb[0].mxu0
    %v670 = vadd.f32 %v569, %v669
    %v671 = vpop.f32.mrb[0].mxu0
    %v672 = vpop.f32.mrb[0].mxu0
    %v673 = vadd.f32 %v569, %v672
    %v674 = vpop.f32.mrb[0].mxu0
    %675 = vmatprep.mubr.bf16.mxu0 0
    %676 = vmatmul.mubr.bf16.gmra.mrb[0].mxu0 %v532
    %v677 = vpop.f32.mrb[0].mxu0
    %v678 = vadd.f32 %v569, %v677
    %v679 = vpop.f32.mrb[0].mxu0
    %v680 = vpop.f32.mrb[0].mxu0
    %v681 = vadd.f32 %v569, %v680
    %v682 = vpop.f32.mrb[0].mxu0
    %683 = vmatprep.mubr.bf16.mxu0 0
    %684 = vmatmul.mubr.bf16.gmra.mrb[0].mxu0 %v533
    %v685 = vpop.f32.mrb[0].mxu0
    %v686 = vadd.f32 %v569, %v685
    %v687 = vpop.f32.mrb[0].mxu0
    %v688 = vpop.f32.mrb[0].mxu0
    %v689 = vadd.f32 %v569, %v688
    %v690 = vpop.f32.mrb[0].mxu0
    %691 = vmatprep.mubr.bf16.mxu0 0
    %692 = vmatmul.mubr.bf16.gmra.mrb[0].mxu0 %v534
    %v693 = vpop.f32.mrb[0].mxu0
    %v694 = vadd.f32 %v569, %v693
    %v695 = vpop.f32.mrb[0].mxu0
    %v696 = vpop.f32.mrb[0].mxu0
    %v697 = vadd.f32 %v569, %v696
    %v698 = vpop.f32.mrb[0].mxu0
    %699 = vmatprep.mubr.bf16.mxu0 0
    %700 = vmatmul.mubr.bf16.gmra.mrb[0].mxu0 %v535
    %v701 = vpop.f32.mrb[0].mxu0
    %v702 = vadd.f32 %v569, %v701
    %v703 = vpop.f32.mrb[0].mxu0
    %v704 = vpop.f32.mrb[0].mxu0
    %v705 = vadd.f32 %v569, %v704
    %v706 = vpop.f32.mrb[0].mxu0
    %707 = vmatprep.mubr.bf16.mxu0 0
    %708 = vmatmul.mubr.bf16.gmra.mrb[0].mxu0 %v536
    %v709 = vpop.f32.mrb[0].mxu0
    %v710 = vadd.f32 %v569, %v709
    %v711 = vpop.f32.mrb[0].mxu0
    %v712 = vpop.f32.mrb[0].mxu0
    %v713 = vadd.f32 %v569, %v712
    %v714 = vpop.f32.mrb[0].mxu0
    %715 = vmatprep.mubr.bf16.mxu0 0
    %716 = vmatmul.mubr.bf16.gmra.mrb[0].mxu0 %v537
    %v717 = vpop.f32.mrb[0].mxu0
    %v718 = vadd.f32 %v569, %v717
    %v719 = vpop.f32.mrb[0].mxu0
    %v720 = vpop.f32.mrb[0].mxu0
    %v721 = vadd.f32 %v569, %v720
    %v722 = vpop.f32.mrb[0].mxu0
    %723 = vmatprep.mubr.bf16.mxu0 0
    %724 = vmatmul.mubr.bf16.gmra.mrb[0].mxu0 %v538
    %v725 = vpop.f32.mrb[0].mxu0
    %v726 = vadd.f32 %v569, %v725
    %v727 = vpop.f32.mrb[0].mxu0
    %v728 = vpop.f32.mrb[0].mxu0
    %v729 = vadd.f32 %v569, %v728
    %v730 = vpop.f32.mrb[0].mxu0
    %731 = vmatprep.mubr.bf16.mxu0 0
    %732 = vmatmul.mubr.bf16.gmra.mrb[0].mxu0 %v539
    %v733 = vpop.f32.mrb[0].mxu0
    %v734 = vadd.f32 %v569, %v733
    %v735 = vpop.f32.mrb[0].mxu0
    %v736 = vpop.f32.mrb[0].mxu0
    %v737 = vadd.f32 %v569, %v736
    %v738 = vpop.f32.mrb[0].mxu0
    %739 = vmatprep.mubr.bf16.mxu0 0
    %740 = vmatmul.mubr.bf16.gmra.mrb[0].mxu0 %v540
    %v741 = vpop.f32.mrb[0].mxu0
    %v742 = vadd.f32 %v569, %v741
    %v743 = vpop.f32.mrb[0].mxu0
    %v744 = vpop.f32.mrb[0].mxu0
    %v745 = vadd.f32 %v569, %v744
    %v746 = vpop.f32.mrb[0].mxu0
    %747 = vmatprep.mubr.bf16.mxu0 0
    %748 = vmatmul.mubr.bf16.gmra.mrb[0].mxu0 %v541
    %v749 = vpop.f32.mrb[0].mxu0
    %v750 = vadd.f32 %v569, %v749
    %v751 = vpop.f32.mrb[0].mxu0
    %v752 = vpop.f32.mrb[0].mxu0
    %v753 = vadd.f32 %v569, %v752
    %v754 = vpop.f32.mrb[0].mxu0
    %755 = vmatprep.mubr.bf16.mxu0 0
    %756 = vmatmul.mubr.bf16.gmra.mrb[0].mxu0 %v542
    %v757 = vpop.f32.mrb[0].mxu0
    %v758 = vadd.f32 %v569, %v757
    %v759 = vpop.f32.mrb[0].mxu0
    %v760 = vpop.f32.mrb[0].mxu0
    %v761 = vadd.f32 %v569, %v760
    %v762 = vpop.f32.mrb[0].mxu0
    %763 = vmatprep.mubr.bf16.mxu0 0
    %764 = vmatmul.mubr.bf16.gmra.mrb[0].mxu0 %v543
    %v765 = vpop.f32.mrb[0].mxu0
    %v766 = vadd.f32 %v569, %v765
    %v767 = vpop.f32.mrb[0].mxu0
    %v768 = vpop.f32.mrb[0].mxu0
    %v769 = vadd.f32 %v569, %v768
    %v770 = vpop.f32.mrb[0].mxu0
    %771 = vmatprep.mubr.bf16.mxu0 0
    %772 = vmatmul.mubr.bf16.gmra.mrb[0].mxu0 %v544
    %v773 = vpop.f32.mrb[0].mxu0
    %v774 = vadd.f32 %v569, %v773
    %v775 = vpop.f32.mrb[0].mxu0
    %v776 = vpop.f32.mrb[0].mxu0
    %v777 = vadd.f32 %v569, %v776
    %v778 = vpop.f32.mrb[0].mxu0
    %779 = vmatprep.mubr.bf16.mxu0 0
    %780 = vmatmul.mubr.bf16.gmra.mrb[0].mxu0 %v545
    %v781 = vpop.f32.mrb[0].mxu0
    %v782 = vadd.f32 %v569, %v781
    %v783 = vpop.f32.mrb[0].mxu0
    %v784 = vpop.f32.mrb[0].mxu0
    %v785 = vadd.f32 %v569, %v784
    %v786 = vpop.f32.mrb[0].mxu0
    %787 = vmatprep.mubr.bf16.mxu0 0
    %788 = vmatmul.mubr.bf16.gmra.mrb[0].mxu0 %v546
    %v789 = vpop.f32.mrb[0].mxu0
    %v790 = vadd.f32 %v569, %v789
    %v791 = vpop.f32.mrb[0].mxu0
    %v792 = vpop.f32.mrb[0].mxu0
    %v793 = vadd.f32 %v569, %v792
    %v794 = vpop.f32.mrb[0].mxu0
    %795 = vmatprep.mubr.bf16.mxu0 0
    %796 = vmatmul.mubr.bf16.gmra.mrb[0].mxu0 %v547
    %v797 = vpop.f32.mrb[0].mxu0
    %v798 = vadd.f32 %v569, %v797
    %v799 = vpop.f32.mrb[0].mxu0
    %v800 = vpop.f32.mrb[0].mxu0
    %v801 = vadd.f32 %v569, %v800
    %v802 = vpop.f32.mrb[0].mxu0
    %803 = vdwg.mxu0
    %v804 = vtanh.pop %v654
    %v805 = vtanh.pop %v657
    %v806 = vtanh.pop %v662
    %v807 = vtanh.pop %v665
    %v808 = vtanh.pop %v670
    %v809 = vtanh.pop %v673
    %v810 = vtanh.pop %v678
    %v811 = vtanh.pop %v681
    %v812 = vtanh.pop %v686
    %v813 = vtanh.pop %v689
    %v814 = vtanh.pop %v694
    %v815 = vtanh.pop %v697
    %v816 = vtanh.pop %v702
    %v817 = vtanh.pop %v705
    %v818 = vtanh.pop %v710
    %v819 = vtanh.pop %v713
    %v820 = vtanh.pop %v718
    %v821 = vtanh.pop %v721
    %v822 = vtanh.pop %v726
    %v823 = vtanh.pop %v729
    %v824 = vtanh.pop %v734
    %v825 = vtanh.pop %v737
    %v826 = vtanh.pop %v742
    %v827 = vtanh.pop %v745
    %v828 = vtanh.pop %v750
    %v829 = vtanh.pop %v753
    %v830 = vtanh.pop %v758
    %v831 = vtanh.pop %v761
    %v832 = vtanh.pop %v766
    %v833 = vtanh.pop %v769
    %v834 = vtanh.pop %v774
    %v835 = vtanh.pop %v777
    %v836 = vtanh.pop %v782
    %v837 = vtanh.pop %v785
    %v838 = vtanh.pop %v790
    %v839 = vtanh.pop %v793
    %v840 = vtanh.pop %v798
    %v841 = vtanh.pop %v801
    %v842 = vpack.c.bf16 %v805, %v804
    %v843 = vpack.c.bf16 %v807, %v806
    %v844 = vpack.c.bf16 %v809, %v808
    %v845 = vpack.c.bf16 %v811, %v810
    %v846 = vpack.c.bf16 %v813, %v812
    %v847 = vpack.c.bf16 %v815, %v814
    %v848 = vpack.c.bf16 %v817, %v816
    %v849 = vpack.c.bf16 %v819, %v818
    %v850 = vpack.c.bf16 %v821, %v820
    %v851 = vpack.c.bf16 %v823, %v822
    %v852 = vpack.c.bf16 %v825, %v824
    %v853 = vpack.c.bf16 %v827, %v826
    %v854 = vpack.c.bf16 %v829, %v828
    %v855 = vpack.c.bf16 %v831, %v830
    %v856 = vpack.c.bf16 %v833, %v832
    %v857 = vpack.c.bf16 %v835, %v834
    %v858 = vpack.c.bf16 %v837, %v836
    %v859 = vpack.c.bf16 %v839, %v838
    %v860 = vpack.c.bf16 %v841, %v840
    %v861 = vld [vmem:[#allocation8] sm:$0xf]
    %v862 = vld [vmem:[#allocation8 + $0x4] sm:$0xf]
    %v863 = vld [vmem:[#allocation8 + $0x8] sm:$0xf]
    %v864 = vld [vmem:[#allocation8 + $0xc] sm:$0xf]
    %v865 = vld [vmem:[#allocation8 + $0x10] sm:$0xf]
    %v866 = vld [vmem:[#allocation8 + $0x14] sm:$0xf]
    %v867 = vld [vmem:[#allocation8 + $0x18] sm:$0xf]
    %v868 = vld [vmem:[#allocation8 + $0x1c] sm:$0xf]
    %v869 = vld [vmem:[#allocation8 + $0x20] sm:$0xf]
    %v870 = vld [vmem:[#allocation8 + $0x24] sm:$0xf]
    %v871 = vld [vmem:[#allocation8 + $0x28] sm:$0xf]
    %v872 = vld [vmem:[#allocation8 + $0x2c] sm:$0xf]
    %v873 = vld [vmem:[#allocation8 + $0x30] sm:$0xf]
    %v874 = vld [vmem:[#allocation8 + $0x34] sm:$0xf]
    %v875 = vld [vmem:[#allocation8 + $0x38] sm:$0xf]
    %v876 = vld [vmem:[#allocation8 + $0x3c] sm:$0xf]
    %v877 = vld [vmem:[%s6] sm:$0x1]
    %v879 = vlaneseq
    %v880 = vshrl.u32 %v879, 7
    %v881 = vsub.s32 0, %v880
    %v882 = vrot.slane %v877, %v881
    %v900 = vunpack.c.l.b16 %v861
    %v901 = vunpack.c.l.b16 %v862
    %v902 = vunpack.c.l.b16 %v863
    %v903 = vunpack.c.l.b16 %v864
    %v904 = vunpack.c.l.b16 %v865
    %v905 = vunpack.c.l.b16 %v866
    %v906 = vunpack.c.l.b16 %v867
    %v907 = vunpack.c.l.b16 %v868
    %v908 = vunpack.c.l.b16 %v869
    %v909 = vunpack.c.l.b16 %v870
    %v910 = vunpack.c.l.b16 %v871
    %v911 = vunpack.c.l.b16 %v872
    %v912 = vunpack.c.l.b16 %v873
    %v913 = vunpack.c.l.b16 %v874
    %v914 = vunpack.c.l.b16 %v875
    %v915 = vunpack.c.l.b16 %v876
    %v916 = vpack.c.b16 %v901, %v900
    %v917 = vpack.c.b16 %v903, %v902
    %v918 = vpack.c.b16 %v905, %v904
    %v919 = vpack.c.b16 %v907, %v906
    %v920 = vpack.c.b16 %v909, %v908
    %v921 = vpack.c.b16 %v911, %v910
    %v922 = vpack.c.b16 %v913, %v912
    %v923 = vpack.c.b16 %v915, %v914
    %932 = vmatprep.subr.bf16.mxu0 0
    %933 = vmatpush1.bf16.msra.mxu0 %v916
    %934 = vmatprep.subr.bf16.mxu0 0
    %935 = vmatpush1.bf16.msra.mxu0 %v917
    %936 = vmatprep.subr.bf16.mxu0 0
    %937 = vmatpush1.bf16.msra.mxu0 %v918
    %938 = vmatprep.subr.bf16.mxu0 0
    %939 = vmatpush1.bf16.msra.mxu0 %v919
    %940 = vmatprep.subr.bf16.mxu0 0
    %941 = vmatpush1.bf16.msra.mxu0 %v920
    %942 = vmatprep.subr.bf16.mxu0 0
    %943 = vmatpush1.bf16.msra.mxu0 %v921
    %944 = vmatprep.subr.bf16.mxu0 0
    %945 = vmatpush1.bf16.msra.mxu0 %v922
    %946 = vmatprep.subr.bf16.mxu0 0
    %947 = vmatpush1.bf16.msra.mxu0 %v923
    %948 = vmatprep.subr.bf16.mxu0 0
    %949 = vmatpush1.bf16.msra.mxu0 0
    %950 = vmatprep.subr.bf16.mxu0 0
    %951 = vmatpush1.bf16.msra.mxu0 0
    %952 = vmatprep.subr.bf16.mxu0 0
    %953 = vmatpush1.bf16.msra.mxu0 0
    %954 = vmatprep.subr.bf16.mxu0 0
    %955 = vmatpush1.bf16.msra.mxu0 0
    %956 = vmatprep.subr.bf16.mxu0 0
    %957 = vmatpush1.bf16.msra.mxu0 0
    %958 = vmatprep.subr.bf16.mxu0 0
    %959 = vmatpush1.bf16.msra.mxu0 0
    %960 = vmatprep.subr.bf16.mxu0 0
    %961 = vmatpush1.bf16.msra.mxu0 0
    %962 = vmatprep.subr.bf16.mxu0 0
    %963 = vmatpush1.bf16.msra.mxu0 0
    %964 = vmatprep.mubr.bf16.mxu0 0
    %965 = vmatmul.mubr.bf16.gmra.mrb[0].mxu0 %v842
    %v966 = vpop.f32.mrb[0].mxu0
    %v967 = vadd.f32 %v882, %v966
    %v968 = vpop.f32.mrb[0].mxu0
    %v969 = vpop.f32.mrb[0].mxu0
    %v970 = vadd.f32 %v882, %v969
    %v971 = vpop.f32.mrb[0].mxu0
    %972 = vmatprep.mubr.bf16.mxu0 0
    %973 = vmatmul.mubr.bf16.gmra.mrb[0].mxu0 %v843
    %v974 = vpop.f32.mrb[0].mxu0
    %v975 = vadd.f32 %v882, %v974
    %v976 = vpop.f32.mrb[0].mxu0
    %v977 = vpop.f32.mrb[0].mxu0
    %v978 = vadd.f32 %v882, %v977
    %v979 = vpop.f32.mrb[0].mxu0
    %980 = vmatprep.mubr.bf16.mxu0 0
    %981 = vmatmul.mubr.bf16.gmra.mrb[0].mxu0 %v844
    %v982 = vpop.f32.mrb[0].mxu0
    %v983 = vadd.f32 %v882, %v982
    %v984 = vpop.f32.mrb[0].mxu0
    %v985 = vpop.f32.mrb[0].mxu0
    %v986 = vadd.f32 %v882, %v985
    %v987 = vpop.f32.mrb[0].mxu0
    %988 = vmatprep.mubr.bf16.mxu0 0
    %989 = vmatmul.mubr.bf16.gmra.mrb[0].mxu0 %v845
    %v990 = vpop.f32.mrb[0].mxu0
    %v991 = vadd.f32 %v882, %v990
    %v992 = vpop.f32.mrb[0].mxu0
    %v993 = vpop.f32.mrb[0].mxu0
    %v994 = vadd.f32 %v882, %v993
    %v995 = vpop.f32.mrb[0].mxu0
    %996 = vmatprep.mubr.bf16.mxu0 0
    %997 = vmatmul.mubr.bf16.gmra.mrb[0].mxu0 %v846
    %v998 = vpop.f32.mrb[0].mxu0
    %v999 = vadd.f32 %v882, %v998
    %v1000 = vpop.f32.mrb[0].mxu0
    %v1001 = vpop.f32.mrb[0].mxu0
    %v1002 = vadd.f32 %v882, %v1001
    %v1003 = vpop.f32.mrb[0].mxu0
    %1004 = vmatprep.mubr.bf16.mxu0 0
    %1005 = vmatmul.mubr.bf16.gmra.mrb[0].mxu0 %v847
    %v1006 = vpop.f32.mrb[0].mxu0
    %v1007 = vadd.f32 %v882, %v1006
    %v1008 = vpop.f32.mrb[0].mxu0
    %v1009 = vpop.f32.mrb[0].mxu0
    %v1010 = vadd.f32 %v882, %v1009
    %v1011 = vpop.f32.mrb[0].mxu0
    %1012 = vmatprep.mubr.bf16.mxu0 0
    %1013 = vmatmul.mubr.bf16.gmra.mrb[0].mxu0 %v848
    %v1014 = vpop.f32.mrb[0].mxu0
    %v1015 = vadd.f32 %v882, %v1014
    %v1016 = vpop.f32.mrb[0].mxu0
    %v1017 = vpop.f32.mrb[0].mxu0
    %v1018 = vadd.f32 %v882, %v1017
    %v1019 = vpop.f32.mrb[0].mxu0
    %1020 = vmatprep.mubr.bf16.mxu0 0
    %1021 = vmatmul.mubr.bf16.gmra.mrb[0].mxu0 %v849
    %v1022 = vpop.f32.mrb[0].mxu0
    %v1023 = vadd.f32 %v882, %v1022
    %v1024 = vpop.f32.mrb[0].mxu0
    %v1025 = vpop.f32.mrb[0].mxu0
    %v1026 = vadd.f32 %v882, %v1025
    %v1027 = vpop.f32.mrb[0].mxu0
    %1028 = vmatprep.mubr.bf16.mxu0 0
    %1029 = vmatmul.mubr.bf16.gmra.mrb[0].mxu0 %v850
    %v1030 = vpop.f32.mrb[0].mxu0
    %v1031 = vadd.f32 %v882, %v1030
    %v1032 = vpop.f32.mrb[0].mxu0
    %v1033 = vpop.f32.mrb[0].mxu0
    %v1034 = vadd.f32 %v882, %v1033
    %v1035 = vpop.f32.mrb[0].mxu0
    %1036 = vmatprep.mubr.bf16.mxu0 0
    %1037 = vmatmul.mubr.bf16.gmra.mrb[0].mxu0 %v851
    %v1038 = vpop.f32.mrb[0].mxu0
    %v1039 = vadd.f32 %v882, %v1038
    %v1040 = vpop.f32.mrb[0].mxu0
    %v1041 = vpop.f32.mrb[0].mxu0
    %v1042 = vadd.f32 %v882, %v1041
    %v1043 = vpop.f32.mrb[0].mxu0
    %1044 = vmatprep.mubr.bf16.mxu0 0
    %1045 = vmatmul.mubr.bf16.gmra.mrb[0].mxu0 %v852
    %v1046 = vpop.f32.mrb[0].mxu0
    %v1047 = vadd.f32 %v882, %v1046
    %v1048 = vpop.f32.mrb[0].mxu0
    %v1049 = vpop.f32.mrb[0].mxu0
    %v1050 = vadd.f32 %v882, %v1049
    %v1051 = vpop.f32.mrb[0].mxu0
    %1052 = vmatprep.mubr.bf16.mxu0 0
    %1053 = vmatmul.mubr.bf16.gmra.mrb[0].mxu0 %v853
    %v1054 = vpop.f32.mrb[0].mxu0
    %v1055 = vadd.f32 %v882, %v1054
    %v1056 = vpop.f32.mrb[0].mxu0
    %v1057 = vpop.f32.mrb[0].mxu0
    %v1058 = vadd.f32 %v882, %v1057
    %v1059 = vpop.f32.mrb[0].mxu0
    %1060 = vmatprep.mubr.bf16.mxu0 0
    %1061 = vmatmul.mubr.bf16.gmra.mrb[0].mxu0 %v854
    %v1062 = vpop.f32.mrb[0].mxu0
    %v1063 = vadd.f32 %v882, %v1062
    %v1064 = vpop.f32.mrb[0].mxu0
    %v1065 = vpop.f32.mrb[0].mxu0
    %v1066 = vadd.f32 %v882, %v1065
    %v1067 = vpop.f32.mrb[0].mxu0
    %1068 = vmatprep.mubr.bf16.mxu0 0
    %1069 = vmatmul.mubr.bf16.gmra.mrb[0].mxu0 %v855
    %v1070 = vpop.f32.mrb[0].mxu0
    %v1071 = vadd.f32 %v882, %v1070
    %v1072 = vpop.f32.mrb[0].mxu0
    %v1073 = vpop.f32.mrb[0].mxu0
    %v1074 = vadd.f32 %v882, %v1073
    %v1075 = vpop.f32.mrb[0].mxu0
    %1076 = vmatprep.mubr.bf16.mxu0 0
    %1077 = vmatmul.mubr.bf16.gmra.mrb[0].mxu0 %v856
    %v1078 = vpop.f32.mrb[0].mxu0
    %v1079 = vadd.f32 %v882, %v1078
    %v1080 = vpop.f32.mrb[0].mxu0
    %v1081 = vpop.f32.mrb[0].mxu0
    %v1082 = vadd.f32 %v882, %v1081
    %v1083 = vpop.f32.mrb[0].mxu0
    %1084 = vmatprep.mubr.bf16.mxu0 0
    %1085 = vmatmul.mubr.bf16.gmra.mrb[0].mxu0 %v857
    %v1086 = vpop.f32.mrb[0].mxu0
    %v1087 = vadd.f32 %v882, %v1086
    %v1088 = vpop.f32.mrb[0].mxu0
    %v1089 = vpop.f32.mrb[0].mxu0
    %v1090 = vadd.f32 %v882, %v1089
    %v1091 = vpop.f32.mrb[0].mxu0
    %1092 = vmatprep.mubr.bf16.mxu0 0
    %1093 = vmatmul.mubr.bf16.gmra.mrb[0].mxu0 %v858
    %v1094 = vpop.f32.mrb[0].mxu0
    %v1095 = vadd.f32 %v882, %v1094
    %v1096 = vpop.f32.mrb[0].mxu0
    %v1097 = vpop.f32.mrb[0].mxu0
    %v1098 = vadd.f32 %v882, %v1097
    %v1099 = vpop.f32.mrb[0].mxu0
    %1100 = vmatprep.mubr.bf16.mxu0 0
    %1101 = vmatmul.mubr.bf16.gmra.mrb[0].mxu0 %v859
    %v1102 = vpop.f32.mrb[0].mxu0
    %v1103 = vadd.f32 %v882, %v1102
    %v1104 = vpop.f32.mrb[0].mxu0
    %v1105 = vpop.f32.mrb[0].mxu0
    %v1106 = vadd.f32 %v882, %v1105
    %v1107 = vpop.f32.mrb[0].mxu0
    %1108 = vmatprep.mubr.bf16.mxu0 0
    %1109 = vmatmul.mubr.bf16.gmra.mrb[0].mxu0 %v860
    %v1110 = vpop.f32.mrb[0].mxu0
    %v1111 = vadd.f32 %v882, %v1110
    %v1112 = vpop.f32.mrb[0].mxu0
    %v1113 = vpop.f32.mrb[0].mxu0
    %v1114 = vadd.f32 %v882, %v1113
    %v1115 = vpop.f32.mrb[0].mxu0
    %1116 = vdwg.mxu0
    %v1117 = vtanh.pop %v967
    %v1118 = vtanh.pop %v970
    %v1119 = vtanh.pop %v975
    %v1120 = vtanh.pop %v978
    %v1121 = vtanh.pop %v983
    %v1122 = vtanh.pop %v986
    %v1123 = vtanh.pop %v991
    %v1124 = vtanh.pop %v994
    %v1125 = vtanh.pop %v999
    %v1126 = vtanh.pop %v1002
    %v1127 = vtanh.pop %v1007
    %v1128 = vtanh.pop %v1010
    %v1129 = vtanh.pop %v1015
    %v1130 = vtanh.pop %v1018
    %v1131 = vtanh.pop %v1023
    %v1132 = vtanh.pop %v1026
    %v1133 = vtanh.pop %v1031
    %v1134 = vtanh.pop %v1034
    %v1135 = vtanh.pop %v1039
    %v1136 = vtanh.pop %v1042
    %v1137 = vtanh.pop %v1047
    %v1138 = vtanh.pop %v1050
    %v1139 = vtanh.pop %v1055
    %v1140 = vtanh.pop %v1058
    %v1141 = vtanh.pop %v1063
    %v1142 = vtanh.pop %v1066
    %v1143 = vtanh.pop %v1071
    %v1144 = vtanh.pop %v1074
    %v1145 = vtanh.pop %v1079
    %v1146 = vtanh.pop %v1082
    %v1147 = vtanh.pop %v1087
    %v1148 = vtanh.pop %v1090
    %v1149 = vtanh.pop %v1095
    %v1150 = vtanh.pop %v1098
    %v1151 = vtanh.pop %v1103
    %v1152 = vtanh.pop %v1106
    %v1153 = vtanh.pop %v1111
    %v1154 = vtanh.pop %v1114
    %1155 = vst [vmem:[#allocation10] sm:$0xff] %v1117
    %1156 = vst [vmem:[#allocation10 + $0x8] sm:$0xff] %v1118
    %1157 = vst [vmem:[#allocation10 + $0x10] sm:$0xff] %v1119
    %1158 = vst [vmem:[#allocation10 + $0x18] sm:$0xff] %v1120
    %1159 = vst [vmem:[#allocation10 + $0x20] sm:$0xff] %v1121
    %1160 = vst [vmem:[#allocation10 + $0x28] sm:$0xff] %v1122
    %1161 = vst [vmem:[#allocation10 + $0x30] sm:$0xff] %v1123
    %1162 = vst [vmem:[#allocation10 + $0x38] sm:$0xff] %v1124
    %1163 = vst [vmem:[#allocation10 + $0x40] sm:$0xff] %v1125
    %1164 = vst [vmem:[#allocation10 + $0x48] sm:$0xff] %v1126
    %1165 = vst [vmem:[#allocation10 + $0x50] sm:$0xff] %v1127
    %1166 = vst [vmem:[#allocation10 + $0x58] sm:$0xff] %v1128
    %1167 = vst [vmem:[#allocation10 + $0x60] sm:$0xff] %v1129
    %1168 = vst [vmem:[#allocation10 + $0x68] sm:$0xff] %v1130
    %1169 = vst [vmem:[#allocation10 + $0x70] sm:$0xff] %v1131
    %1170 = vst [vmem:[#allocation10 + $0x78] sm:$0xff] %v1132
    %1171 = vst [vmem:[#allocation10 + $0x80] sm:$0xff] %v1133
    %1172 = vst [vmem:[#allocation10 + $0x88] sm:$0xff] %v1134
    %1173 = vst [vmem:[#allocation10 + $0x90] sm:$0xff] %v1135
    %1174 = vst [vmem:[#allocation10 + $0x98] sm:$0xff] %v1136
    %1175 = vst [vmem:[#allocation10 + $0xa0] sm:$0xff] %v1137
    %1176 = vst [vmem:[#allocation10 + $0xa8] sm:$0xff] %v1138
    %1177 = vst [vmem:[#allocation10 + $0xb0] sm:$0xff] %v1139
    %1178 = vst [vmem:[#allocation10 + $0xb8] sm:$0xff] %v1140
    %1179 = vst [vmem:[#allocation10 + $0xc0] sm:$0xff] %v1141
    %1180 = vst [vmem:[#allocation10 + $0xc8] sm:$0xff] %v1142
    %1181 = vst [vmem:[#allocation10 + $0xd0] sm:$0xff] %v1143
    %1182 = vst [vmem:[#allocation10 + $0xd8] sm:$0xff] %v1144
    %1183 = vst [vmem:[#allocation10 + $0xe0] sm:$0xff] %v1145
    %1184 = vst [vmem:[#allocation10 + $0xe8] sm:$0xff] %v1146
    %1185 = vst [vmem:[#allocation10 + $0xf0] sm:$0xff] %v1147
    %1186 = vst [vmem:[#allocation10 + $0xf8] sm:$0xff] %v1148
    %1187 = vst [vmem:[#allocation10 + $0x100] sm:$0xff] %v1149
    %1188 = vst [vmem:[#allocation10 + $0x108] sm:$0xff] %v1150
    %1189 = vst [vmem:[#allocation10 + $0x110] sm:$0xff] %v1151
    %1190 = vst [vmem:[#allocation10 + $0x118] sm:$0xff] %v1152
    %1191 = vst [vmem:[#allocation10 + $0x120] sm:$0xff] %v1153
    %1192 = vst [vmem:[#allocation10 + $0x128] sm:$0xff] %v1154
    // Predicated region
    $region46: #{tpu_custom_call.1} parent=1 // pred_check
      _
    $region47: #{tpu_custom_call.1} parent=1 // pred_check_branch
      %1194 = sbr.rel (0) target = $region49
    $region48: #{tpu_custom_call.1} parent=1 // pred_region
      %s1196 = ssub.s32 4864, 4864
      %1197 = vsyncadd [#allocation4], %s1196
      %s1198 = sshll.u32 [#allocation10], 4
      %s1199 = int_to_ptr.vmem [resolvable:$true] %s1198
      %1204 = dma.vmem_to_hbm [thread:$0]  %s1199, 4864, %s7, [#allocation4], 128, 128, 8
    $region49: #{tpu_custom_call.1} parent=1 // pred_fallthru
      _
    // Predicated region
    $region50: #{tpu_custom_call.1} parent=1 // pred_check
      _
    $region51: #{tpu_custom_call.1} parent=1 // pred_check_branch
      %1206 = sbr.rel (0) target = $region53
    $region52: #{tpu_custom_call.1} parent=1 // pred_region
      %1207 = dma.done [#allocation4], 4864
    $region53: #{tpu_custom_call.1} parent=1 // pred_fallthru
      _
    %1208 = vsyncpa [#allocation3], 1
    %1209 = vsyncpa [#allocation6], 1
    %1210 = vsyncpa [#allocation9], 1
    %1211 = vsyncpa [#allocation4], 1

</llo_original>
